<compile_context>
chip_gen: v7x
topology: tpu7x:2x2x1
jax: 0.10.0
libtpu: 0.0.40
codegen_flags: <defaults>
</compile_context>

<pallas_src>
import functools

import jax
import jax.numpy as jnp
from jax.experimental import pallas as pl
from jax.experimental.pallas import tpu as pltpu

LANE = 128


def _round_up(v, m):
    return (v + m - 1) // m * m


def _pad2(arr, shape):
    pads = [(0, s - d) for s, d in zip(shape, arr.shape)]
    return jnp.pad(arr, pads)


def _vmem_limit(est_bytes):
    # Cap below physical per-core VMEM (64 MiB on v7x, 128 MiB on v5e/v6e).
    cap = 64 << 20
    try:
        cap = int(pltpu.get_tpu_info().vmem_capacity_bytes)
    except Exception:
        pass
    return int(min(max(int(est_bytes), 32 << 20), int(0.9 * cap)))


# ----------------- fused PANConv x2 + classifier projection ------------------


def _panconv_x2_kernel(c1_ref, c2_ref, a_ref, x_ref, dinv1_ref, dinv2_ref,
                       w1_ref, b1_ref, w2_ref, b2_ref, wt_ref, wb_ref,
                       hwt_ref, hwb_ref, *, k):
    a = a_ref[...]                       # bf16 (N, N) adjacency (exact counts)
    dinv1 = dinv1_ref[...]               # f32 (N, 1) normalizers (wrapper-computed)
    dinv2 = dinv2_ref[...]

    def pan_apply(xx, dinv, c_ref):
        # dinv * (M @ (dinv * xx)) with M = sum_i c_i A^i, computed as a skinny
        # power iteration -- M is never materialized.  bf16 MXU / f32 accumulate.
        t = dinv * xx.astype(jnp.float32)
        acc = c_ref[0] * t
        for i in range(1, k + 1):
            t = jnp.dot(a, t.astype(jnp.bfloat16),
                        preferred_element_type=jnp.float32)
            acc = acc + c_ref[i] * t
        return dinv * acc

    # layer 1: PANConv -> Linear -> ReLU
    h1 = pan_apply(x_ref[...], dinv1, c1_ref)
    h1 = jnp.dot(h1.astype(jnp.bfloat16), w1_ref[...],
                 preferred_element_type=jnp.float32) + b1_ref[...]
    h1 = jnp.maximum(h1, 0.0)

    # layer 2: PANConv -> Linear
    h2 = pan_apply(h1, dinv2, c2_ref)
    h2 = jnp.dot(h2.astype(jnp.bfloat16), w2_ref[...],
                 preferred_element_type=jnp.float32) + b2_ref[...]

    # classifier projection fused while h2 is resident:
    #   cat([h[row], h[col]], -1) @ Wc == (h @ Wc[:H])[row] + (h @ Wc[H:])[col]
    # NOTE: padded node rows of h2 (and hw_t/hw_b) contain bias/ReLU garbage
    # because padded rows still get deg = filt[0] > 0 from the identity term.
    # This is benign: padded A columns are zero, and padded edges are sliced
    # off in the wrapper.  Do NOT rely on padded rows being zero.
    h2b = h2.astype(jnp.bfloat16)
    hwt_ref[...] = jnp.dot(h2b, wt_ref[...],
                           preferred_element_type=jnp.float32).astype(hwt_ref.dtype)
    hwb_ref[...] = jnp.dot(h2b, wb_ref[...],
                           preferred_element_type=jnp.float32).astype(hwb_ref.dtype)


def panconv_x2_project(a_bf, x_bf, dinv1, dinv2, c1, c2,
                       w1, b1, w2, b2, wt, wb):
    n_p = a_bf.shape[0]
    cin_p = x_bf.shape[1]
    hid_p = w1.shape[1]
    out_p = wt.shape[1]
    k = c1.shape[0] - 1

    # MXU flops / bytes on the PADDED dims (advisory scheduler hint).
    flops = int(2 * n_p * n_p * max(k, 0) * (cin_p + hid_p)
                + 2 * n_p * (cin_p * hid_p + hid_p * hid_p + 2 * hid_p * out_p))
    bytes_accessed = int(2 * n_p * n_p + 2 * n_p * cin_p + 8 * n_p
                         + 2 * (cin_p * hid_p + hid_p * hid_p + 2 * hid_p * out_p)
                         + 4 * (2 * hid_p + out_p) + 2 * 2 * n_p * out_p)

    # Resident VMEM estimate: bf16 A + bf16 x + dinv + bf16 weights + f32
    # biases + bf16 outputs + f32 temporaries (t / acc / h).
    resident = (2 * n_p * n_p + 2 * n_p * cin_p + 8 * n_p
                + 2 * (cin_p * hid_p + hid_p * hid_p + 2 * hid_p * out_p)
                + 4 * (2 * hid_p + out_p)
                + 2 * 2 * n_p * out_p
                + 4 * 4 * n_p * max(cin_p, hid_p))

    kernel = functools.partial(_panconv_x2_kernel, k=k)
    return pl.pallas_call(
        kernel,
        out_shape=(jax.ShapeDtypeStruct((n_p, out_p), jnp.bfloat16),
                   jax.ShapeDtypeStruct((n_p, out_p), jnp.bfloat16)),
        in_specs=[
            pl.BlockSpec(memory_space=pltpu.MemorySpace.SMEM),  # c1 (k+1,) cumprod coeffs
            pl.BlockSpec(memory_space=pltpu.MemorySpace.SMEM),  # c2 (k+1,)
            pl.BlockSpec(memory_space=pltpu.MemorySpace.VMEM),  # A   bf16 (N, N)
            pl.BlockSpec(memory_space=pltpu.MemorySpace.VMEM),  # x   bf16 (N, Cin)
            pl.BlockSpec(memory_space=pltpu.MemorySpace.VMEM),  # dinv1 f32 (N, 1)
            pl.BlockSpec(memory_space=pltpu.MemorySpace.VMEM),  # dinv2 f32 (N, 1)
            pl.BlockSpec(memory_space=pltpu.MemorySpace.VMEM),  # w1  bf16 (Cin, H)
            pl.BlockSpec(memory_space=pltpu.MemorySpace.VMEM),  # b1  f32  (1, H)
            pl.BlockSpec(memory_space=pltpu.MemorySpace.VMEM),  # w2  bf16 (H, H)
            pl.BlockSpec(memory_space=pltpu.MemorySpace.VMEM),  # b2  f32  (1, H)
            pl.BlockSpec(memory_space=pltpu.MemorySpace.VMEM),  # wt  bf16 (H, OUT)
            pl.BlockSpec(memory_space=pltpu.MemorySpace.VMEM),  # wb  bf16 (H, OUT)
        ],
        out_specs=(pl.BlockSpec(memory_space=pltpu.MemorySpace.VMEM),
                   pl.BlockSpec(memory_space=pltpu.MemorySpace.VMEM)),
        compiler_params=pltpu.CompilerParams(
            vmem_limit_bytes=_vmem_limit(1.3 * resident)),
        cost_estimate=pl.CostEstimate(
            flops=flops, transcendentals=0, bytes_accessed=bytes_accessed),
    )(c1, c2, a_bf, x_bf, dinv1, dinv2, w1, b1, w2, b2, wt, wb)


# --------------------------- edge classifier ---------------------------------


def _edge_cls_kernel(row_ref, col_ref, hwt_ref, hwb_ref, b_ref, out_ref):
    te = out_ref.shape[0]
    n_p = hwt_ref.shape[0]
    # Vectorized gather: one-hot selection matrices on the MXU (no per-edge
    # scalar loop, no masked single-row loads/stores).
    lane_ids = jax.lax.broadcasted_iota(jnp.int32, (te, n_p), 1)
    sel_r = jnp.where(lane_ids == row_ref[...], 1.0, 0.0).astype(jnp.bfloat16)
    sel_c = jnp.where(lane_ids == col_ref[...], 1.0, 0.0).astype(jnp.bfloat16)
    out = (jnp.dot(sel_r, hwt_ref[...], preferred_element_type=jnp.float32)
           + jnp.dot(sel_c, hwb_ref[...], preferred_element_type=jnp.float32)
           + b_ref[...])
    out_ref[...] = out.astype(out_ref.dtype)


def edge_classifier(hwt, hwb, row2d, col2d, bc, *, te):
    e_p = row2d.shape[0]
    n_p, out_p = hwt.shape
    resident = (2 * (2 * n_p * out_p)        # hw tables (bf16), possibly 2-buffered
                + 2 * 2 * (te * n_p)         # one-hot temporaries (bf16)
                + 2 * 4 * te * out_p         # output block (f32, 2-buffered)
                + 4 * out_p + 2 * 4 * te)
    return pl.pallas_call(
        _edge_cls_kernel,
        out_shape=jax.ShapeDtypeStruct((e_p, out_p), jnp.float32),
        grid=(e_p // te,),
        in_specs=[
            pl.BlockSpec((te, 1), lambda i: (i, 0)),        # row indices tile
            pl.BlockSpec((te, 1), lambda i: (i, 0)),        # col indices tile
            pl.BlockSpec((n_p, out_p), lambda i: (0, 0)),   # hw_t (grid-invariant)
            pl.BlockSpec((n_p, out_p), lambda i: (0, 0)),   # hw_b (grid-invariant)
            pl.BlockSpec((1, out_p), lambda i: (0, 0)),     # bias
        ],
        out_specs=pl.BlockSpec((te, out_p), lambda i: (i, 0)),
        compiler_params=pltpu.CompilerParams(
            dimension_semantics=("parallel",),
            vmem_limit_bytes=_vmem_limit(1.5 * resident)),
    )(row2d, col2d, hwt, hwb, bc)


# ------------------------------ full model -----------------------------------


def pan_conv_edge_classifier(x, edge_index, params, *, edge_tile=128):
    """Forward pass of PANConvEdgeClassifier."""
    n, cin = x.shape
    hidden = params["w1"].shape[1]
    out_ch = params["wc"].shape[1]
    e = edge_index.shape[1]
    k = params["filt1"].shape[0] - 1

    n_p = _round_up(n, LANE)
    cin_p = _round_up(cin, LANE)
    hid_p = _round_up(hidden, LANE)
    out_p = _round_up(out_ch, LANE)
    te = edge_tile
    e_p = _round_up(e, te)

    # Dense adjacency A[dst, src] (glue: scatter-add stays in plain JAX).
    a = jnp.zeros((n_p, n_p), jnp.float32).at[
        edge_index[1], edge_index[0]].add(1.0)

    # Degree / rsqrt normalization chain hoisted to the wrapper (exact f32,
    # O(k*N^2) matvecs -- negligible vs the in-kernel feature chain).
    def deg_chain(filt):
        c = filt[0]
        deg = c * jnp.ones((n_p, 1), jnp.float32)
        u = jnp.ones((n_p, 1), jnp.float32)
        for i in range(1, k + 1):
            u = a @ u
            c = c * filt[i]
            deg = deg + c * u
        return jnp.where(deg > 0.0, jax.lax.rsqrt(deg), 0.0)

    dinv1 = deg_chain(params["filt1"])
    dinv2 = deg_chain(params["filt2"])
    c1 = jnp.cumprod(params["filt1"]).astype(jnp.float32)
    c2 = jnp.cumprod(params["filt2"]).astype(jnp.float32)

    # Wrapper-side bf16 casts + lane-granule zero-padding (semantics-preserving).
    a_bf = a.astype(jnp.bfloat16)   # small integer counts -> exact in bf16
    x_bf = _pad2(x.astype(jnp.float32), (n_p, cin_p)).astype(jnp.bfloat16)
    w1 = _pad2(params["w1"], (cin_p, hid_p)).astype(jnp.bfloat16)
    b1 = _pad2(params["b1"], (1, hid_p)).astype(jnp.float32)
    w2 = _pad2(params["w2"], (hid_p, hid_p)).astype(jnp.bfloat16)
    b2 = _pad2(params["b2"], (1, hid_p)).astype(jnp.float32)
    wc = params["wc"]                                   # (2*hidden, out_ch)
    wt = _pad2(wc[:hidden], (hid_p, out_p)).astype(jnp.bfloat16)
    wb = _pad2(wc[hidden:], (hid_p, out_p)).astype(jnp.bfloat16)
    bc = _pad2(params["bc"], (1, out_p)).astype(jnp.float32)

    hwt, hwb = panconv_x2_project(a_bf, x_bf, dinv1, dinv2, c1, c2,
                                  w1, b1, w2, b2, wt, wb)

    row2d = jnp.zeros((e_p, 1), jnp.int32).at[:e, 0].set(
        edge_index[0].astype(jnp.int32))
    col2d = jnp.zeros((e_p, 1), jnp.int32).at[:e, 0].set(
        edge_index[1].astype(jnp.int32))

    out = edge_classifier(hwt, hwb, row2d, col2d, bc, te=te)
    return out[:e, :out_ch]


# ------------------------------ reference ------------------------------------


def reference(x, edge_index, params):
    n = x.shape[0]
    a = jnp.zeros((n, n), jnp.float32).at[edge_index[1], edge_index[0]].add(1.0)

    def conv(xx, w, b, filt):
        eye = jnp.eye(n, dtype=jnp.float32)
        tmp = filt[0] * eye
        m = tmp
        for i in range(1, filt.shape[0]):
            tmp = (tmp @ a) * filt[i]
            m = m + tmp
        deg = m.sum(axis=1)
        dinv = jnp.where(deg > 0, deg ** -0.5, 0.0)
        mn = dinv[:, None] * m * dinv[None, :]
        return (mn @ xx) @ w + b

    h = jax.nn.relu(conv(x, params["w1"], params["b1"], params["filt1"]))
    h = conv(h, params["w2"], params["b2"], params["filt2"])
    emb = jnp.concatenate([h[edge_index[0]], h[edge_index[1]]], axis=-1)
    return emb @ params["wc"] + params["bc"]


# -------------------------------- main ----------------------------------------


if __name__ == "__main__":
    N, E = 16, 48                 # nodes, edges
    IN_CH, HIDDEN, OUT_CH, K = 8, 32, 4, 1

    key = jax.random.PRNGKey(0)
    k_x, k_e, k_w1, k_b1, k_w2, k_b2, k_wc, k_bc = jax.random.split(key, 8)

    x = jax.random.normal(k_x, (N, IN_CH), jnp.float32)
    edge_index = jax.random.randint(k_e, (2, E), 0, N, dtype=jnp.int32)

    params = {
        # PANConv1: Linear(IN_CH -> HIDDEN), filter weights filled with 0.5
        "w1": 0.1 * jax.random.normal(k_w1, (IN_CH, HIDDEN), jnp.float32),
        "b1": 0.1 * jax.random.normal(k_b1, (1, HIDDEN), jnp.float32),
        "filt1": jnp.full((K + 1,), 0.5, jnp.float32),
        # PANConv2: Linear(HIDDEN -> HIDDEN)
        "w2": 0.1 * jax.random.normal(k_w2, (HIDDEN, HIDDEN), jnp.float32),
        "b2": 0.1 * jax.random.normal(k_b2, (1, HIDDEN), jnp.float32),
        "filt2": jnp.full((K + 1,), 0.5, jnp.float32),
        # classifier: Linear(2*HIDDEN -> OUT_CH)
        "wc": 0.1 * jax.random.normal(k_wc, (2 * HIDDEN, OUT_CH), jnp.float32),
        "bc": 0.1 * jax.random.normal(k_bc, (1, OUT_CH), jnp.float32),
    }

    out = pan_conv_edge_classifier(x, edge_index, params)
    out = jax.block_until_ready(out)
    assert out.shape == (E, OUT_CH), out.shape

    ref = jax.block_until_ready(reference(x, edge_index, params))
    # bf16 MXU operands (f32 accumulate) => slightly looser tolerance than pure f32.
    assert jnp.allclose(out, ref, rtol=2e-2, atol=2e-2), (
        float(jnp.max(jnp.abs(out - ref))))

    print("KERNEL_OK")
</pallas_src>

<mosaic_0001>
module attributes {stable_mosaic.version = 11 : i64} {
  func.func @_panconv_x2_kernel(%arg0: memref<2xf32, #tpu.memory_space<smem>>, %arg1: memref<2xf32, #tpu.memory_space<smem>>, %arg2: memref<128x128xbf16, #tpu.memory_space<vmem>>, %arg3: memref<128x128xbf16, #tpu.memory_space<vmem>>, %arg4: memref<128x1xf32, #tpu.memory_space<vmem>>, %arg5: memref<128x1xf32, #tpu.memory_space<vmem>>, %arg6: memref<128x128xbf16, #tpu.memory_space<vmem>>, %arg7: memref<1x128xf32, #tpu.memory_space<vmem>>, %arg8: memref<128x128xbf16, #tpu.memory_space<vmem>>, %arg9: memref<1x128xf32, #tpu.memory_space<vmem>>, %arg10: memref<128x128xbf16, #tpu.memory_space<vmem>>, %arg11: memref<128x128xbf16, #tpu.memory_space<vmem>>, %arg12: memref<128x128xbf16, #tpu.memory_space<vmem>>, %arg13: memref<128x128xbf16, #tpu.memory_space<vmem>>) attributes {dimension_semantics = [], scalar_prefetch = 0 : i64, scratch_operands = 0 : i64, tpu.core_type = #tpu.core_type<tc>} {
    %c0 = arith.constant 0 : index
    %c0_0 = arith.constant 0 : index
    %0 = vector.load %arg2[%c0, %c0_0] : memref<128x128xbf16, #tpu.memory_space<vmem>>, vector<128x128xbf16>
    %c0_1 = arith.constant 0 : index
    %c0_2 = arith.constant 0 : index
    %1 = vector.load %arg4[%c0_1, %c0_2] : memref<128x1xf32, #tpu.memory_space<vmem>>, vector<128x1xf32>
    %c0_3 = arith.constant 0 : index
    %c0_4 = arith.constant 0 : index
    %2 = vector.load %arg5[%c0_3, %c0_4] : memref<128x1xf32, #tpu.memory_space<vmem>>, vector<128x1xf32>
    %c0_5 = arith.constant 0 : index
    %c0_6 = arith.constant 0 : index
    %3 = vector.load %arg3[%c0_5, %c0_6] : memref<128x128xbf16, #tpu.memory_space<vmem>>, vector<128x128xbf16>
    %4 = arith.extf %3 : vector<128x128xbf16> to vector<128x128xf32>
    %5 = vector.broadcast %1 : vector<128x1xf32> to vector<128x128xf32>
    %6 = arith.mulf %5, %4 : vector<128x128xf32>
    %c0_7 = arith.constant 0 : index
    %7 = memref.load %arg0[%c0_7] : memref<2xf32, #tpu.memory_space<smem>>
    %8 = vector.broadcast %7 : f32 to vector<128x128xf32>
    %9 = arith.mulf %8, %6 : vector<128x128xf32>
    %10 = arith.truncf %6 : vector<128x128xf32> to vector<128x128xbf16>
    %cst = arith.constant dense<0.000000e+00> : vector<128x128xf32>
    %11 = tpu.matmul %0, %10, %cst {dimension_numbers = #tpu.dot_dimension_numbers<[1], [0], [0], [1], [0, 0, 1, 1], [], []>} : vector<128x128xbf16>, vector<128x128xbf16>, vector<128x128xf32> -> vector<128x128xf32>
    %c1 = arith.constant 1 : index
    %12 = memref.load %arg0[%c1] : memref<2xf32, #tpu.memory_space<smem>>
    %13 = vector.broadcast %12 : f32 to vector<128x128xf32>
    %14 = arith.mulf %13, %11 : vector<128x128xf32>
    %15 = arith.addf %9, %14 : vector<128x128xf32>
    %16 = vector.broadcast %1 : vector<128x1xf32> to vector<128x128xf32>
    %17 = arith.mulf %16, %15 : vector<128x128xf32>
    %18 = arith.truncf %17 : vector<128x128xf32> to vector<128x128xbf16>
    %c0_8 = arith.constant 0 : index
    %c0_9 = arith.constant 0 : index
    %19 = vector.load %arg6[%c0_8, %c0_9] : memref<128x128xbf16, #tpu.memory_space<vmem>>, vector<128x128xbf16>
    %cst_10 = arith.constant dense<0.000000e+00> : vector<128x128xf32>
    %20 = tpu.matmul %18, %19, %cst_10 {dimension_numbers = #tpu.dot_dimension_numbers<[1], [0], [0], [1], [0, 0, 1, 1], [], []>} : vector<128x128xbf16>, vector<128x128xbf16>, vector<128x128xf32> -> vector<128x128xf32>
    %c0_11 = arith.constant 0 : index
    %c0_12 = arith.constant 0 : index
    %21 = vector.load %arg7[%c0_11, %c0_12] : memref<1x128xf32, #tpu.memory_space<vmem>>, vector<1x128xf32>
    %22 = vector.broadcast %21 : vector<1x128xf32> to vector<128x128xf32>
    %23 = arith.addf %20, %22 : vector<128x128xf32>
    %cst_13 = arith.constant 0.000000e+00 : f32
    %24 = vector.broadcast %cst_13 : f32 to vector<128x128xf32>
    %25 = arith.maximumf %23, %24 : vector<128x128xf32>
    %26 = vector.broadcast %2 : vector<128x1xf32> to vector<128x128xf32>
    %27 = arith.mulf %26, %25 : vector<128x128xf32>
    %c0_14 = arith.constant 0 : index
    %28 = memref.load %arg1[%c0_14] : memref<2xf32, #tpu.memory_space<smem>>
    %29 = vector.broadcast %28 : f32 to vector<128x128xf32>
    %30 = arith.mulf %29, %27 : vector<128x128xf32>
    %31 = arith.truncf %27 : vector<128x128xf32> to vector<128x128xbf16>
    %cst_15 = arith.constant dense<0.000000e+00> : vector<128x128xf32>
    %32 = tpu.matmul %0, %31, %cst_15 {dimension_numbers = #tpu.dot_dimension_numbers<[1], [0], [0], [1], [0, 0, 1, 1], [], []>} : vector<128x128xbf16>, vector<128x128xbf16>, vector<128x128xf32> -> vector<128x128xf32>
    %c1_16 = arith.constant 1 : index
    %33 = memref.load %arg1[%c1_16] : memref<2xf32, #tpu.memory_space<smem>>
    %34 = vector.broadcast %33 : f32 to vector<128x128xf32>
    %35 = arith.mulf %34, %32 : vector<128x128xf32>
    %36 = arith.addf %30, %35 : vector<128x128xf32>
    %37 = vector.broadcast %2 : vector<128x1xf32> to vector<128x128xf32>
    %38 = arith.mulf %37, %36 : vector<128x128xf32>
    %39 = arith.truncf %38 : vector<128x128xf32> to vector<128x128xbf16>
    %c0_17 = arith.constant 0 : index
    %c0_18 = arith.constant 0 : index
    %40 = vector.load %arg8[%c0_17, %c0_18] : memref<128x128xbf16, #tpu.memory_space<vmem>>, vector<128x128xbf16>
    %cst_19 = arith.constant dense<0.000000e+00> : vector<128x128xf32>
    %41 = tpu.matmul %39, %40, %cst_19 {dimension_numbers = #tpu.dot_dimension_numbers<[1], [0], [0], [1], [0, 0, 1, 1], [], []>} : vector<128x128xbf16>, vector<128x128xbf16>, vector<128x128xf32> -> vector<128x128xf32>
    %c0_20 = arith.constant 0 : index
    %c0_21 = arith.constant 0 : index
    %42 = vector.load %arg9[%c0_20, %c0_21] : memref<1x128xf32, #tpu.memory_space<vmem>>, vector<1x128xf32>
    %43 = vector.broadcast %42 : vector<1x128xf32> to vector<128x128xf32>
    %44 = arith.addf %41, %43 : vector<128x128xf32>
    %45 = arith.truncf %44 : vector<128x128xf32> to vector<128x128xbf16>
    %c0_22 = arith.constant 0 : index
    %c0_23 = arith.constant 0 : index
    %46 = vector.load %arg10[%c0_22, %c0_23] : memref<128x128xbf16, #tpu.memory_space<vmem>>, vector<128x128xbf16>
    %cst_24 = arith.constant dense<0.000000e+00> : vector<128x128xf32>
    %47 = tpu.matmul %45, %46, %cst_24 {dimension_numbers = #tpu.dot_dimension_numbers<[1], [0], [0], [1], [0, 0, 1, 1], [], []>} : vector<128x128xbf16>, vector<128x128xbf16>, vector<128x128xf32> -> vector<128x128xf32>
    %48 = arith.truncf %47 : vector<128x128xf32> to vector<128x128xbf16>
    %c0_25 = arith.constant 0 : index
    %c0_26 = arith.constant 0 : index
    %49 = vector.load %arg12[%c0_25, %c0_26] : memref<128x128xbf16, #tpu.memory_space<vmem>>, vector<128x128xbf16>
    tpu.vector_store %arg12[%c0_25, %c0_26], %48 {strides = array<i32>} : memref<128x128xbf16, #tpu.memory_space<vmem>>, vector<128x128xbf16>,
    %c0_27 = arith.constant 0 : index
    %c0_28 = arith.constant 0 : index
    %50 = vector.load %arg11[%c0_27, %c0_28] : memref<128x128xbf16, #tpu.memory_space<vmem>>, vector<128x128xbf16>
    %cst_29 = arith.constant dense<0.000000e+00> : vector<128x128xf32>
    %51 = tpu.matmul %45, %50, %cst_29 {dimension_numbers = #tpu.dot_dimension_numbers<[1], [0], [0], [1], [0, 0, 1, 1], [], []>} : vector<128x128xbf16>, vector<128x128xbf16>, vector<128x128xf32> -> vector<128x128xf32>
    %52 = arith.truncf %51 : vector<128x128xf32> to vector<128x128xbf16>
    %c0_30 = arith.constant 0 : index
    %c0_31 = arith.constant 0 : index
    %53 = vector.load %arg13[%c0_30, %c0_31] : memref<128x128xbf16, #tpu.memory_space<vmem>>, vector<128x128xbf16>
    tpu.vector_store %arg13[%c0_30, %c0_31], %52 {strides = array<i32>} : memref<128x128xbf16, #tpu.memory_space<vmem>>, vector<128x128xbf16>,
    return
  }
}

</mosaic_0001>

<llo_original>
// kernel: tpu_custom_call.1
$region0: #{tpu_custom_call.1}
  #allocation0 [shape = 'u32[]', space=smem, size = 0x4, offset = 0x4, fixed_abs, tag = 'smem constant byte address 0x4 - core index']
  #allocation1 [shape = 'u32[144,128]{1,0:T(1,128)}', space=vmem, size = 0x12000, scoped, tag = 'internal scratch']
  %s0 = inlined_call_operand.vmem [shape: f32[2], index: 0, kind: input, shape index: {}]
  %s1 = inlined_call_operand.vmem [shape: f32[2], index: 1, kind: input, shape index: {}]
  %s2 = inlined_call_operand.vmem [shape: bf16[128,128], index: 2, kind: input, shape index: {}]
  %s3 = inlined_call_operand.vmem [shape: bf16[128,128], index: 3, kind: input, shape index: {}]
  %s4 = inlined_call_operand.vmem [shape: f32[128,1], index: 4, kind: input, shape index: {}]
  %s5 = inlined_call_operand.vmem [shape: f32[128,1], index: 5, kind: input, shape index: {}]
  %s6 = inlined_call_operand.vmem [shape: bf16[128,128], index: 6, kind: input, shape index: {}]
  %s7 = inlined_call_operand.vmem [shape: f32[1,128], index: 7, kind: input, shape index: {}]
  %s8 = inlined_call_operand.vmem [shape: bf16[128,128], index: 8, kind: input, shape index: {}]
  %s9 = inlined_call_operand.vmem [shape: f32[1,128], index: 9, kind: input, shape index: {}]
  %s10 = inlined_call_operand.hbm [shape: bf16[128,128], index: 10, kind: input, shape index: {}]
  %s11 = inlined_call_operand.hbm [shape: bf16[128,128], index: 11, kind: input, shape index: {}]
  %s12 = inlined_call_operand.hbm [shape: bf16[128,128], index: 12, kind: output, shape index: {0}]
  %s13 = inlined_call_operand.hbm [shape: bf16[128,128], index: 13, kind: output, shape index: {1}]
  %14 = xla_tuple %s12, %s13
  %s15 = sld [smem:[#allocation0]]
  $region82: #{tpu_custom_call.1} parent=0
    _
  %s17 = ssub.s32 1, %s15
  %s18 = scalar_select 0, %s17, %s15
  $region1: #{tpu_custom_call.1} parent=0
    #allocation2 [shape = 'u8[512]{0}', space=smem, size = 0x200, scoped, tag = 'input window, operand 0, single buffered']
    #allocation3 [shape = 's32[1]{0}', space=sflag, size = 0x4, scoped, tag = 'scoped memory for tpu_custom_call.1']
    #allocation4 [shape = 's32[1]{0}', space=sflag, size = 0x4, scoped, tag = 'scoped memory for tpu_custom_call.1']
    #allocation5 [shape = 's32[1]{0}', space=sflag, size = 0x4, scoped, tag = 'scoped memory for tpu_custom_call.1']
    #allocation6 [shape = 'u8[512]{0}', space=smem, size = 0x200, scoped, tag = 'input window, operand 1, single buffered']
    #allocation7 [shape = 's32[1]{0}', space=sflag, size = 0x4, scoped, tag = 'scoped memory for tpu_custom_call.1']
    #allocation8 [shape = 'u8[32768]{0}', space=vmem, size = 0x8000, scoped, tag = 'input window, operand 10, single buffered']
    #allocation9 [shape = 'u8[32768]{0}', space=vmem, size = 0x8000, scoped, tag = 'input window, operand 11, single buffered']
    #allocation10 [shape = 's32[1]{0}', space=sflag, size = 0x4, scoped, tag = 'scoped memory for tpu_custom_call.1']
    #allocation11 [shape = 'u8[32768]{0}', space=vmem, size = 0x8000, scoped, tag = 'output window, operand 0, single buffered']
    #allocation12 [shape = 'u8[32768]{0}', space=vmem, size = 0x8000, scoped, tag = 'output window, operand 1, single buffered']
    #allocation13 [shape = 's32[1]{0}', space=sflag, size = 0x4, scoped, tag = 'scoped memory for tpu_custom_call.1']
    %19 = vsyncpa [#allocation5], 0
    %20 = vsyncpa [#allocation7], 0
    %21 = vsyncpa [#allocation3], 0
    %22 = vsyncpa [#allocation10], 0
    %23 = vsyncpa [#allocation4], 0
    %24 = vsyncpa [#allocation13], 0
    // Predicated region
    $region2: #{tpu_custom_call.1} parent=1 // pred_check
      _
    $region3: #{tpu_custom_call.1} parent=1 // pred_check_branch
      %26 = sbr.rel (0) target = $region5
    $region4: #{tpu_custom_call.1} parent=1 // pred_region
      %s28 = ssub.s32 16, 16
      %29 = vsyncadd [#allocation5], %s28
      %s31 = sshll.u32 %s0, 4
      %s32 = int_to_ptr.vmem [resolvable:$true] %s31
      %34 = dma.vmem_to_smem %s32, 16, [#allocation2], [#allocation5]
    $region5: #{tpu_custom_call.1} parent=1 // pred_fallthru
      _
    // Predicated region
    $region6: #{tpu_custom_call.1} parent=1 // pred_check
      _
    $region7: #{tpu_custom_call.1} parent=1 // pred_check_branch
      %36 = sbr.rel (0) target = $region9
    $region8: #{tpu_custom_call.1} parent=1 // pred_region
      %s38 = ssub.s32 16, 16
      %39 = vsyncadd [#allocation7], %s38
      %s41 = sshll.u32 %s1, 4
      %s42 = int_to_ptr.vmem [resolvable:$true] %s41
      %44 = dma.vmem_to_smem %s42, 16, [#allocation6], [#allocation7]
    $region9: #{tpu_custom_call.1} parent=1 // pred_fallthru
      _
    // Predicated region
    $region10: #{tpu_custom_call.1} parent=1 // pred_check
      _
    $region11: #{tpu_custom_call.1} parent=1 // pred_check_branch
      %46 = sbr.rel (0) target = $region13
    $region12: #{tpu_custom_call.1} parent=1 // pred_region
      _
    $region13: #{tpu_custom_call.1} parent=1 // pred_fallthru
      _
    // Predicated region
    $region14: #{tpu_custom_call.1} parent=1 // pred_check
      _
    $region15: #{tpu_custom_call.1} parent=1 // pred_check_branch
      %48 = sbr.rel (0) target = $region17
    $region16: #{tpu_custom_call.1} parent=1 // pred_region
      _
    $region17: #{tpu_custom_call.1} parent=1 // pred_fallthru
      _
    // Predicated region
    $region18: #{tpu_custom_call.1} parent=1 // pred_check
      _
    $region19: #{tpu_custom_call.1} parent=1 // pred_check_branch
      %50 = sbr.rel (0) target = $region21
    $region20: #{tpu_custom_call.1} parent=1 // pred_region
      _
    $region21: #{tpu_custom_call.1} parent=1 // pred_fallthru
      _
    // Predicated region
    $region22: #{tpu_custom_call.1} parent=1 // pred_check
      _
    $region23: #{tpu_custom_call.1} parent=1 // pred_check_branch
      %52 = sbr.rel (0) target = $region25
    $region24: #{tpu_custom_call.1} parent=1 // pred_region
      _
    $region25: #{tpu_custom_call.1} parent=1 // pred_fallthru
      _
    // Predicated region
    $region26: #{tpu_custom_call.1} parent=1 // pred_check
      _
    $region27: #{tpu_custom_call.1} parent=1 // pred_check_branch
      %54 = sbr.rel (0) target = $region29
    $region28: #{tpu_custom_call.1} parent=1 // pred_region
      _
    $region29: #{tpu_custom_call.1} parent=1 // pred_fallthru
      _
    // Predicated region
    $region30: #{tpu_custom_call.1} parent=1 // pred_check
      _
    $region31: #{tpu_custom_call.1} parent=1 // pred_check_branch
      %56 = sbr.rel (0) target = $region33
    $region32: #{tpu_custom_call.1} parent=1 // pred_region
      _
    $region33: #{tpu_custom_call.1} parent=1 // pred_fallthru
      _
    // Predicated region
    $region34: #{tpu_custom_call.1} parent=1 // pred_check
      _
    $region35: #{tpu_custom_call.1} parent=1 // pred_check_branch
      %58 = sbr.rel (0) target = $region37
    $region36: #{tpu_custom_call.1} parent=1 // pred_region
      _
    $region37: #{tpu_custom_call.1} parent=1 // pred_fallthru
      _
    // Predicated region
    $region38: #{tpu_custom_call.1} parent=1 // pred_check
      _
    $region39: #{tpu_custom_call.1} parent=1 // pred_check_branch
      %60 = sbr.rel (0) target = $region41
    $region40: #{tpu_custom_call.1} parent=1 // pred_region
      _
    $region41: #{tpu_custom_call.1} parent=1 // pred_fallthru
      _
    // Predicated region
    $region42: #{tpu_custom_call.1} parent=1 // pred_check
      _
    $region43: #{tpu_custom_call.1} parent=1 // pred_check_branch
      %62 = sbr.rel (0) target = $region45
    $region44: #{tpu_custom_call.1} parent=1 // pred_region
      %s64 = ssub.s32 1024, 1024
      %65 = vsyncadd [#allocation3], %s64
      %s66 = sshll.u32 [#allocation8], 4
      %s67 = int_to_ptr.vmem [resolvable:$true] %s66
      %72 = dma.hbm_to_vmem [thread:$0]  %s10, 1024, %s67, [#allocation3], 64, 64, 4
    $region45: #{tpu_custom_call.1} parent=1 // pred_fallthru
      _
    // Predicated region
    $region46: #{tpu_custom_call.1} parent=1 // pred_check
      _
    $region47: #{tpu_custom_call.1} parent=1 // pred_check_branch
      %74 = sbr.rel (0) target = $region49
    $region48: #{tpu_custom_call.1} parent=1 // pred_region
      %s76 = ssub.s32 1024, 1024
      %77 = vsyncadd [#allocation10], %s76
      %s78 = sshll.u32 [#allocation9], 4
      %s79 = int_to_ptr.vmem [resolvable:$true] %s78
      %84 = dma.hbm_to_vmem [thread:$0]  %s11, 1024, %s79, [#allocation10], 64, 64, 4
    $region49: #{tpu_custom_call.1} parent=1 // pred_fallthru
      _
    // Predicated region
    $region50: #{tpu_custom_call.1} parent=1 // pred_check
      _
    $region51: #{tpu_custom_call.1} parent=1 // pred_check_branch
      %86 = sbr.rel (0) target = $region53
    $region52: #{tpu_custom_call.1} parent=1 // pred_region
      %87 = dma.done [#allocation5], 16
    $region53: #{tpu_custom_call.1} parent=1 // pred_fallthru
      _
    // Predicated region
    $region54: #{tpu_custom_call.1} parent=1 // pred_check
      _
    $region55: #{tpu_custom_call.1} parent=1 // pred_check_branch
      %89 = sbr.rel (0) target = $region57
    $region56: #{tpu_custom_call.1} parent=1 // pred_region
      %90 = dma.done [#allocation7], 16
    $region57: #{tpu_custom_call.1} parent=1 // pred_fallthru
      _
    // Predicated region
    $region58: #{tpu_custom_call.1} parent=1 // pred_check
      _
    $region59: #{tpu_custom_call.1} parent=1 // pred_check_branch
      %92 = sbr.rel (0) target = $region61
    $region60: #{tpu_custom_call.1} parent=1 // pred_region
      %93 = dma.done [#allocation3], 1024
    $region61: #{tpu_custom_call.1} parent=1 // pred_fallthru
      _
    // Predicated region
    $region62: #{tpu_custom_call.1} parent=1 // pred_check
      _
    $region63: #{tpu_custom_call.1} parent=1 // pred_check_branch
      %95 = sbr.rel (0) target = $region65
    $region64: #{tpu_custom_call.1} parent=1 // pred_region
      %96 = dma.done [#allocation10], 1024
    $region65: #{tpu_custom_call.1} parent=1 // pred_fallthru
      _
    %97 = sfence
    %v99 = vld [vmem:[%s2] sm:$0xf]
    %v100 = vld [vmem:[%s2 + $0x4] sm:$0xf]
    %v101 = vld [vmem:[%s2 + $0x8] sm:$0xf]
    %v102 = vld [vmem:[%s2 + $0xc] sm:$0xf]
    %v103 = vld [vmem:[%s2 + $0x10] sm:$0xf]
    %v104 = vld [vmem:[%s2 + $0x14] sm:$0xf]
    %v105 = vld [vmem:[%s2 + $0x18] sm:$0xf]
    %v106 = vld [vmem:[%s2 + $0x1c] sm:$0xf]
    %v107 = vld [vmem:[%s2 + $0x20] sm:$0xf]
    %v108 = vld [vmem:[%s2 + $0x24] sm:$0xf]
    %v109 = vld [vmem:[%s2 + $0x28] sm:$0xf]
    %v110 = vld [vmem:[%s2 + $0x2c] sm:$0xf]
    %v111 = vld [vmem:[%s2 + $0x30] sm:$0xf]
    %v112 = vld [vmem:[%s2 + $0x34] sm:$0xf]
    %v113 = vld [vmem:[%s2 + $0x38] sm:$0xf]
    %v114 = vld [vmem:[%s2 + $0x3c] sm:$0xf]
    %v115 = vld [vmem:[%s4] sm:$0xff]
    %v116 = vld [vmem:[%s4 + $0x8] sm:$0xff]
    %v117 = vld [vmem:[%s4 + $0x10] sm:$0xff]
    %v118 = vld [vmem:[%s4 + $0x18] sm:$0xff]
    %v119 = vld [vmem:[%s4 + $0x20] sm:$0xff]
    %v120 = vld [vmem:[%s4 + $0x28] sm:$0xff]
    %v121 = vld [vmem:[%s4 + $0x30] sm:$0xff]
    %v122 = vld [vmem:[%s4 + $0x38] sm:$0xff]
    %v123 = vld [vmem:[%s4 + $0x40] sm:$0xff]
    %v124 = vld [vmem:[%s4 + $0x48] sm:$0xff]
    %v125 = vld [vmem:[%s4 + $0x50] sm:$0xff]
    %v126 = vld [vmem:[%s4 + $0x58] sm:$0xff]
    %v127 = vld [vmem:[%s4 + $0x60] sm:$0xff]
    %v128 = vld [vmem:[%s4 + $0x68] sm:$0xff]
    %v129 = vld [vmem:[%s4 + $0x70] sm:$0xff]
    %v130 = vld [vmem:[%s4 + $0x78] sm:$0xff]
    %v131 = vld [vmem:[%s5] sm:$0xff]
    %v132 = vld [vmem:[%s5 + $0x8] sm:$0xff]
    %v133 = vld [vmem:[%s5 + $0x10] sm:$0xff]
    %v134 = vld [vmem:[%s5 + $0x18] sm:$0xff]
    %v135 = vld [vmem:[%s5 + $0x20] sm:$0xff]
    %v136 = vld [vmem:[%s5 + $0x28] sm:$0xff]
    %v137 = vld [vmem:[%s5 + $0x30] sm:$0xff]
    %v138 = vld [vmem:[%s5 + $0x38] sm:$0xff]
    %v139 = vld [vmem:[%s5 + $0x40] sm:$0xff]
    %v140 = vld [vmem:[%s5 + $0x48] sm:$0xff]
    %v141 = vld [vmem:[%s5 + $0x50] sm:$0xff]
    %v142 = vld [vmem:[%s5 + $0x58] sm:$0xff]
    %v143 = vld [vmem:[%s5 + $0x60] sm:$0xff]
    %v144 = vld [vmem:[%s5 + $0x68] sm:$0xff]
    %v145 = vld [vmem:[%s5 + $0x70] sm:$0xff]
    %v146 = vld [vmem:[%s5 + $0x78] sm:$0xff]
    %v147 = vld [vmem:[%s3] sm:$0xf]
    %v148 = vld [vmem:[%s3 + $0x4] sm:$0xf]
    %v149 = vld [vmem:[%s3 + $0x8] sm:$0xf]
    %v150 = vld [vmem:[%s3 + $0xc] sm:$0xf]
    %v151 = vld [vmem:[%s3 + $0x10] sm:$0xf]
    %v152 = vld [vmem:[%s3 + $0x14] sm:$0xf]
    %v153 = vld [vmem:[%s3 + $0x18] sm:$0xf]
    %v154 = vld [vmem:[%s3 + $0x1c] sm:$0xf]
    %v155 = vld [vmem:[%s3 + $0x20] sm:$0xf]
    %v156 = vld [vmem:[%s3 + $0x24] sm:$0xf]
    %v157 = vld [vmem:[%s3 + $0x28] sm:$0xf]
    %v158 = vld [vmem:[%s3 + $0x2c] sm:$0xf]
    %v159 = vld [vmem:[%s3 + $0x30] sm:$0xf]
    %v160 = vld [vmem:[%s3 + $0x34] sm:$0xf]
    %v161 = vld [vmem:[%s3 + $0x38] sm:$0xf]
    %v162 = vld [vmem:[%s3 + $0x3c] sm:$0xf]
    %v163 = vunpack.c.l.bf16 %v147
    %v164 = vunpack.c.l.bf16 %v148
    %v165 = vunpack.c.l.bf16 %v149
    %v166 = vunpack.c.l.bf16 %v150
    %v167 = vunpack.c.l.bf16 %v151
    %v168 = vunpack.c.l.bf16 %v152
    %v169 = vunpack.c.l.bf16 %v153
    %v170 = vunpack.c.l.bf16 %v154
    %v171 = vunpack.c.l.bf16 %v155
    %v172 = vunpack.c.l.bf16 %v156
    %v173 = vunpack.c.l.bf16 %v157
    %v174 = vunpack.c.l.bf16 %v158
    %v175 = vunpack.c.l.bf16 %v159
    %v176 = vunpack.c.l.bf16 %v160
    %v177 = vunpack.c.l.bf16 %v161
    %v178 = vunpack.c.l.bf16 %v162
    %180 = vset.pattern.permute.xlu0 0
    %181 = vperm.xlu0 %180, %v115
    %v182 = vpop.permute.xlu0 %181
    %185 = vset.pattern.permute.xlu0 0
    %186 = vperm.xlu0 %185, %v116
    %v187 = vpop.permute.xlu0 %186
    %190 = vset.pattern.permute.xlu0 0
    %191 = vperm.xlu0 %190, %v117
    %v192 = vpop.permute.xlu0 %191
    %195 = vset.pattern.permute.xlu0 0
    %196 = vperm.xlu0 %195, %v118
    %v197 = vpop.permute.xlu0 %196
    %200 = vset.pattern.permute.xlu0 0
    %201 = vperm.xlu0 %200, %v119
    %v202 = vpop.permute.xlu0 %201
    %205 = vset.pattern.permute.xlu0 0
    %206 = vperm.xlu0 %205, %v120
    %v207 = vpop.permute.xlu0 %206
    %210 = vset.pattern.permute.xlu0 0
    %211 = vperm.xlu0 %210, %v121
    %v212 = vpop.permute.xlu0 %211
    %215 = vset.pattern.permute.xlu0 0
    %216 = vperm.xlu0 %215, %v122
    %v217 = vpop.permute.xlu0 %216
    %220 = vset.pattern.permute.xlu0 0
    %221 = vperm.xlu0 %220, %v123
    %v222 = vpop.permute.xlu0 %221
    %225 = vset.pattern.permute.xlu0 0
    %226 = vperm.xlu0 %225, %v124
    %v227 = vpop.permute.xlu0 %226
    %230 = vset.pattern.permute.xlu0 0
    %231 = vperm.xlu0 %230, %v125
    %v232 = vpop.permute.xlu0 %231
    %235 = vset.pattern.permute.xlu0 0
    %236 = vperm.xlu0 %235, %v126
    %v237 = vpop.permute.xlu0 %236
    %240 = vset.pattern.permute.xlu0 0
    %241 = vperm.xlu0 %240, %v127
    %v242 = vpop.permute.xlu0 %241
    %245 = vset.pattern.permute.xlu0 0
    %246 = vperm.xlu0 %245, %v128
    %v247 = vpop.permute.xlu0 %246
    %250 = vset.pattern.permute.xlu0 0
    %251 = vperm.xlu0 %250, %v129
    %v252 = vpop.permute.xlu0 %251
    %255 = vset.pattern.permute.xlu0 0
    %256 = vperm.xlu0 %255, %v130
    %v257 = vpop.permute.xlu0 %256
    %v259 = vmul.f32 %v182, %v163
    %v260 = vmul.f32 %v187, %v164
    %v261 = vmul.f32 %v192, %v165
    %v262 = vmul.f32 %v197, %v166
    %v263 = vmul.f32 %v202, %v167
    %v264 = vmul.f32 %v207, %v168
    %v265 = vmul.f32 %v212, %v169
    %v266 = vmul.f32 %v217, %v170
    %v267 = vmul.f32 %v222, %v171
    %v268 = vmul.f32 %v227, %v172
    %v269 = vmul.f32 %v232, %v173
    %v270 = vmul.f32 %v237, %v174
    %v271 = vmul.f32 %v242, %v175
    %v272 = vmul.f32 %v247, %v176
    %v273 = vmul.f32 %v252, %v177
    %v274 = vmul.f32 %v257, %v178
    %s275 = sld [smem:[#allocation2]]
    %v276 = vstv %s275
    %v277 = vmul.f32 %v276, %v259
    %v278 = vmul.f32 %v276, %v260
    %v279 = vmul.f32 %v276, %v261
    %v280 = vmul.f32 %v276, %v262
    %v281 = vmul.f32 %v276, %v263
    %v282 = vmul.f32 %v276, %v264
    %v283 = vmul.f32 %v276, %v265
    %v284 = vmul.f32 %v276, %v266
    %v285 = vmul.f32 %v276, %v267
    %v286 = vmul.f32 %v276, %v268
    %v287 = vmul.f32 %v276, %v269
    %v288 = vmul.f32 %v276, %v270
    %v289 = vmul.f32 %v276, %v271
    %v290 = vmul.f32 %v276, %v272
    %v291 = vmul.f32 %v276, %v273
    %v292 = vmul.f32 %v276, %v274
    %v293 = vpack.c.bf16 %v260, %v259
    %v294 = vpack.c.bf16 %v262, %v261
    %v295 = vpack.c.bf16 %v264, %v263
    %v296 = vpack.c.bf16 %v266, %v265
    %v297 = vpack.c.bf16 %v268, %v267
    %v298 = vpack.c.bf16 %v270, %v269
    %v299 = vpack.c.bf16 %v272, %v271
    %v300 = vpack.c.bf16 %v274, %v273
    %v317 = vunpack.c.l.b16 %v99
    %v318 = vunpack.c.l.b16 %v100
    %v319 = vunpack.c.l.b16 %v101
    %v320 = vunpack.c.l.b16 %v102
    %v321 = vunpack.c.l.b16 %v103
    %v322 = vunpack.c.l.b16 %v104
    %v323 = vunpack.c.l.b16 %v105
    %v324 = vunpack.c.l.b16 %v106
    %v325 = vunpack.c.l.b16 %v107
    %v326 = vunpack.c.l.b16 %v108
    %v327 = vunpack.c.l.b16 %v109
    %v328 = vunpack.c.l.b16 %v110
    %v329 = vunpack.c.l.b16 %v111
    %v330 = vunpack.c.l.b16 %v112
    %v331 = vunpack.c.l.b16 %v113
    %v332 = vunpack.c.l.b16 %v114
    %v333 = vpack.c.b16 %v318, %v317
    %v334 = vpack.c.b16 %v320, %v319
    %v335 = vpack.c.b16 %v322, %v321
    %v336 = vpack.c.b16 %v324, %v323
    %v337 = vpack.c.b16 %v326, %v325
    %v338 = vpack.c.b16 %v328, %v327
    %v339 = vpack.c.b16 %v330, %v329
    %v340 = vpack.c.b16 %v332, %v331
    %349 = vmatprep.subr.bf16.mxu0 0
    %350 = vmatpush1.bf16.msra.mxu0 %v293
    %351 = vmatprep.subr.bf16.mxu0 0
    %352 = vmatpush1.bf16.msra.mxu0 %v294
    %353 = vmatprep.subr.bf16.mxu0 0
    %354 = vmatpush1.bf16.msra.mxu0 %v295
    %355 = vmatprep.subr.bf16.mxu0 0
    %356 = vmatpush1.bf16.msra.mxu0 %v296
    %357 = vmatprep.subr.bf16.mxu0 0
    %358 = vmatpush1.bf16.msra.mxu0 %v297
    %359 = vmatprep.subr.bf16.mxu0 0
    %360 = vmatpush1.bf16.msra.mxu0 %v298
    %361 = vmatprep.subr.bf16.mxu0 0
    %362 = vmatpush1.bf16.msra.mxu0 %v299
    %363 = vmatprep.subr.bf16.mxu0 0
    %364 = vmatpush1.bf16.msra.mxu0 %v300
    %365 = vmatprep.subr.bf16.mxu0 0
    %366 = vmatpush1.bf16.msra.mxu0 0
    %367 = vmatprep.subr.bf16.mxu0 0
    %368 = vmatpush1.bf16.msra.mxu0 0
    %369 = vmatprep.subr.bf16.mxu0 0
    %370 = vmatpush1.bf16.msra.mxu0 0
    %371 = vmatprep.subr.bf16.mxu0 0
    %372 = vmatpush1.bf16.msra.mxu0 0
    %373 = vmatprep.subr.bf16.mxu0 0
    %374 = vmatpush1.bf16.msra.mxu0 0
    %375 = vmatprep.subr.bf16.mxu0 0
    %376 = vmatpush1.bf16.msra.mxu0 0
    %377 = vmatprep.subr.bf16.mxu0 0
    %378 = vmatpush1.bf16.msra.mxu0 0
    %379 = vmatprep.subr.bf16.mxu0 0
    %380 = vmatpush1.bf16.msra.mxu0 0
    %381 = vmatprep.mubr.bf16.mxu0 0
    %382 = vmatmul.mubr.bf16.gmra.mrb[0].mxu0 %v333
    %v383 = vpop.f32.mrb[0].mxu0
    %v384 = vadd.f32 0.0, %v383
    %v385 = vpop.f32.mrb[0].mxu0
    %v386 = vpop.f32.mrb[0].mxu0
    %v387 = vadd.f32 0.0, %v386
    %v388 = vpop.f32.mrb[0].mxu0
    %389 = vmatprep.mubr.bf16.mxu0 0
    %390 = vmatmul.mubr.bf16.gmra.mrb[0].mxu0 %v334
    %v391 = vpop.f32.mrb[0].mxu0
    %v392 = vadd.f32 0.0, %v391
    %v393 = vpop.f32.mrb[0].mxu0
    %v394 = vpop.f32.mrb[0].mxu0
    %v395 = vadd.f32 0.0, %v394
    %v396 = vpop.f32.mrb[0].mxu0
    %397 = vmatprep.mubr.bf16.mxu0 0
    %398 = vmatmul.mubr.bf16.gmra.mrb[0].mxu0 %v335
    %v399 = vpop.f32.mrb[0].mxu0
    %v400 = vadd.f32 0.0, %v399
    %v401 = vpop.f32.mrb[0].mxu0
    %v402 = vpop.f32.mrb[0].mxu0
    %v403 = vadd.f32 0.0, %v402
    %v404 = vpop.f32.mrb[0].mxu0
    %405 = vmatprep.mubr.bf16.mxu0 0
    %406 = vmatmul.mubr.bf16.gmra.mrb[0].mxu0 %v336
    %v407 = vpop.f32.mrb[0].mxu0
    %v408 = vadd.f32 0.0, %v407
    %v409 = vpop.f32.mrb[0].mxu0
    %v410 = vpop.f32.mrb[0].mxu0
    %v411 = vadd.f32 0.0, %v410
    %v412 = vpop.f32.mrb[0].mxu0
    %413 = vmatprep.mubr.bf16.mxu0 0
    %414 = vmatmul.mubr.bf16.gmra.mrb[0].mxu0 %v337
    %v415 = vpop.f32.mrb[0].mxu0
    %v416 = vadd.f32 0.0, %v415
    %v417 = vpop.f32.mrb[0].mxu0
    %v418 = vpop.f32.mrb[0].mxu0
    %v419 = vadd.f32 0.0, %v418
    %v420 = vpop.f32.mrb[0].mxu0
    %421 = vmatprep.mubr.bf16.mxu0 0
    %422 = vmatmul.mubr.bf16.gmra.mrb[0].mxu0 %v338
    %v423 = vpop.f32.mrb[0].mxu0
    %v424 = vadd.f32 0.0, %v423
    %v425 = vpop.f32.mrb[0].mxu0
    %v426 = vpop.f32.mrb[0].mxu0
    %v427 = vadd.f32 0.0, %v426
    %v428 = vpop.f32.mrb[0].mxu0
    %429 = vmatprep.mubr.bf16.mxu0 0
    %430 = vmatmul.mubr.bf16.gmra.mrb[0].mxu0 %v339
    %v431 = vpop.f32.mrb[0].mxu0
    %v432 = vadd.f32 0.0, %v431
    %v433 = vpop.f32.mrb[0].mxu0
    %v434 = vpop.f32.mrb[0].mxu0
    %v435 = vadd.f32 0.0, %v434
    %v436 = vpop.f32.mrb[0].mxu0
    %437 = vmatprep.mubr.bf16.mxu0 0
    %438 = vmatmul.mubr.bf16.gmra.mrb[0].mxu0 %v340
    %v439 = vpop.f32.mrb[0].mxu0
    %v440 = vadd.f32 0.0, %v439
    %v441 = vpop.f32.mrb[0].mxu0
    %v442 = vpop.f32.mrb[0].mxu0
    %v443 = vadd.f32 0.0, %v442
    %v444 = vpop.f32.mrb[0].mxu0
    %445 = vdwg.mxu0
    %s446 = sld [smem:[#allocation2 + $0x1]]
    %v447 = vstv %s446
    %v448 = vmul.f32 %v447, %v384
    %v449 = vmul.f32 %v447, %v387
    %v450 = vmul.f32 %v447, %v392
    %v451 = vmul.f32 %v447, %v395
    %v452 = vmul.f32 %v447, %v400
    %v453 = vmul.f32 %v447, %v403
    %v454 = vmul.f32 %v447, %v408
    %v455 = vmul.f32 %v447, %v411
    %v456 = vmul.f32 %v447, %v416
    %v457 = vmul.f32 %v447, %v419
    %v458 = vmul.f32 %v447, %v424
    %v459 = vmul.f32 %v447, %v427
    %v460 = vmul.f32 %v447, %v432
    %v461 = vmul.f32 %v447, %v435
    %v462 = vmul.f32 %v447, %v440
    %v463 = vmul.f32 %v447, %v443
    %v464 = vadd.f32 %v277, %v448
    %v465 = vadd.f32 %v278, %v449
    %v466 = vadd.f32 %v279, %v450
    %v467 = vadd.f32 %v280, %v451
    %v468 = vadd.f32 %v281, %v452
    %v469 = vadd.f32 %v282, %v453
    %v470 = vadd.f32 %v283, %v454
    %v471 = vadd.f32 %v284, %v455
    %v472 = vadd.f32 %v285, %v456
    %v473 = vadd.f32 %v286, %v457
    %v474 = vadd.f32 %v287, %v458
    %v475 = vadd.f32 %v288, %v459
    %v476 = vadd.f32 %v289, %v460
    %v477 = vadd.f32 %v290, %v461
    %v478 = vadd.f32 %v291, %v462
    %v479 = vadd.f32 %v292, %v463
    %v480 = vmul.f32 %v182, %v464
    %v481 = vmul.f32 %v187, %v465
    %v482 = vmul.f32 %v192, %v466
    %v483 = vmul.f32 %v197, %v467
    %v484 = vmul.f32 %v202, %v468
    %v485 = vmul.f32 %v207, %v469
    %v486 = vmul.f32 %v212, %v470
    %v487 = vmul.f32 %v217, %v471
    %v488 = vmul.f32 %v222, %v472
    %v489 = vmul.f32 %v227, %v473
    %v490 = vmul.f32 %v232, %v474
    %v491 = vmul.f32 %v237, %v475
    %v492 = vmul.f32 %v242, %v476
    %v493 = vmul.f32 %v247, %v477
    %v494 = vmul.f32 %v252, %v478
    %v495 = vmul.f32 %v257, %v479
    %v496 = vpack.c.bf16 %v481, %v480
    %v497 = vpack.c.bf16 %v483, %v482
    %v498 = vpack.c.bf16 %v485, %v484
    %v499 = vpack.c.bf16 %v487, %v486
    %v500 = vpack.c.bf16 %v489, %v488
    %v501 = vpack.c.bf16 %v491, %v490
    %v502 = vpack.c.bf16 %v493, %v492
    %v503 = vpack.c.bf16 %v495, %v494
    %v504 = vld [vmem:[%s6] sm:$0xf]
    %v505 = vld [vmem:[%s6 + $0x4] sm:$0xf]
    %v506 = vld [vmem:[%s6 + $0x8] sm:$0xf]
    %v507 = vld [vmem:[%s6 + $0xc] sm:$0xf]
    %v508 = vld [vmem:[%s6 + $0x10] sm:$0xf]
    %v509 = vld [vmem:[%s6 + $0x14] sm:$0xf]
    %v510 = vld [vmem:[%s6 + $0x18] sm:$0xf]
    %v511 = vld [vmem:[%s6 + $0x1c] sm:$0xf]
    %v512 = vld [vmem:[%s6 + $0x20] sm:$0xf]
    %v513 = vld [vmem:[%s6 + $0x24] sm:$0xf]
    %v514 = vld [vmem:[%s6 + $0x28] sm:$0xf]
    %v515 = vld [vmem:[%s6 + $0x2c] sm:$0xf]
    %v516 = vld [vmem:[%s6 + $0x30] sm:$0xf]
    %v517 = vld [vmem:[%s6 + $0x34] sm:$0xf]
    %v518 = vld [vmem:[%s6 + $0x38] sm:$0xf]
    %v519 = vld [vmem:[%s6 + $0x3c] sm:$0xf]
    %v520 = vld [vmem:[%s7] sm:$0x1]
    %v522 = vlaneseq
    %v523 = vshrl.u32 %v522, 7
    %v524 = vsub.s32 0, %v523
    %v525 = vrot.slane %v520, %v524
    %v543 = vunpack.c.l.b16 %v504
    %v544 = vunpack.c.l.b16 %v505
    %v545 = vunpack.c.l.b16 %v506
    %v546 = vunpack.c.l.b16 %v507
    %v547 = vunpack.c.l.b16 %v508
    %v548 = vunpack.c.l.b16 %v509
    %v549 = vunpack.c.l.b16 %v510
    %v550 = vunpack.c.l.b16 %v511
    %v551 = vunpack.c.l.b16 %v512
    %v552 = vunpack.c.l.b16 %v513
    %v553 = vunpack.c.l.b16 %v514
    %v554 = vunpack.c.l.b16 %v515
    %v555 = vunpack.c.l.b16 %v516
    %v556 = vunpack.c.l.b16 %v517
    %v557 = vunpack.c.l.b16 %v518
    %v558 = vunpack.c.l.b16 %v519
    %v559 = vpack.c.b16 %v544, %v543
    %v560 = vpack.c.b16 %v546, %v545
    %v561 = vpack.c.b16 %v548, %v547
    %v562 = vpack.c.b16 %v550, %v549
    %v563 = vpack.c.b16 %v552, %v551
    %v564 = vpack.c.b16 %v554, %v553
    %v565 = vpack.c.b16 %v556, %v555
    %v566 = vpack.c.b16 %v558, %v557
    %575 = vmatprep.subr.bf16.mxu0 0
    %576 = vmatpush1.bf16.msra.mxu0 %v559
    %577 = vmatprep.subr.bf16.mxu0 0
    %578 = vmatpush1.bf16.msra.mxu0 %v560
    %579 = vmatprep.subr.bf16.mxu0 0
    %580 = vmatpush1.bf16.msra.mxu0 %v561
    %581 = vmatprep.subr.bf16.mxu0 0
    %582 = vmatpush1.bf16.msra.mxu0 %v562
    %583 = vmatprep.subr.bf16.mxu0 0
    %584 = vmatpush1.bf16.msra.mxu0 %v563
    %585 = vmatprep.subr.bf16.mxu0 0
    %586 = vmatpush1.bf16.msra.mxu0 %v564
    %587 = vmatprep.subr.bf16.mxu0 0
    %588 = vmatpush1.bf16.msra.mxu0 %v565
    %589 = vmatprep.subr.bf16.mxu0 0
    %590 = vmatpush1.bf16.msra.mxu0 %v566
    %591 = vmatprep.subr.bf16.mxu0 0
    %592 = vmatpush1.bf16.msra.mxu0 0
    %593 = vmatprep.subr.bf16.mxu0 0
    %594 = vmatpush1.bf16.msra.mxu0 0
    %595 = vmatprep.subr.bf16.mxu0 0
    %596 = vmatpush1.bf16.msra.mxu0 0
    %597 = vmatprep.subr.bf16.mxu0 0
    %598 = vmatpush1.bf16.msra.mxu0 0
    %599 = vmatprep.subr.bf16.mxu0 0
    %600 = vmatpush1.bf16.msra.mxu0 0
    %601 = vmatprep.subr.bf16.mxu0 0
    %602 = vmatpush1.bf16.msra.mxu0 0
    %603 = vmatprep.subr.bf16.mxu0 0
    %604 = vmatpush1.bf16.msra.mxu0 0
    %605 = vmatprep.subr.bf16.mxu0 0
    %606 = vmatpush1.bf16.msra.mxu0 0
    %607 = vmatprep.mubr.bf16.mxu0 0
    %608 = vmatmul.mubr.bf16.gmra.mrb[0].mxu0 %v496
    %v609 = vpop.f32.mrb[0].mxu0
    %v610 = vadd.f32 %v525, %v609
    %v611 = vpop.f32.mrb[0].mxu0
    %v612 = vpop.f32.mrb[0].mxu0
    %v613 = vadd.f32 %v525, %v612
    %v614 = vpop.f32.mrb[0].mxu0
    %615 = vmatprep.mubr.bf16.mxu0 0
    %616 = vmatmul.mubr.bf16.gmra.mrb[0].mxu0 %v497
    %v617 = vpop.f32.mrb[0].mxu0
    %v618 = vadd.f32 %v525, %v617
    %v619 = vpop.f32.mrb[0].mxu0
    %v620 = vpop.f32.mrb[0].mxu0
    %v621 = vadd.f32 %v525, %v620
    %v622 = vpop.f32.mrb[0].mxu0
    %623 = vmatprep.mubr.bf16.mxu0 0
    %624 = vmatmul.mubr.bf16.gmra.mrb[0].mxu0 %v498
    %v625 = vpop.f32.mrb[0].mxu0
    %v626 = vadd.f32 %v525, %v625
    %v627 = vpop.f32.mrb[0].mxu0
    %v628 = vpop.f32.mrb[0].mxu0
    %v629 = vadd.f32 %v525, %v628
    %v630 = vpop.f32.mrb[0].mxu0
    %631 = vmatprep.mubr.bf16.mxu0 0
    %632 = vmatmul.mubr.bf16.gmra.mrb[0].mxu0 %v499
    %v633 = vpop.f32.mrb[0].mxu0
    %v634 = vadd.f32 %v525, %v633
    %v635 = vpop.f32.mrb[0].mxu0
    %v636 = vpop.f32.mrb[0].mxu0
    %v637 = vadd.f32 %v525, %v636
    %v638 = vpop.f32.mrb[0].mxu0
    %639 = vmatprep.mubr.bf16.mxu0 0
    %640 = vmatmul.mubr.bf16.gmra.mrb[0].mxu0 %v500
    %v641 = vpop.f32.mrb[0].mxu0
    %v642 = vadd.f32 %v525, %v641
    %v643 = vpop.f32.mrb[0].mxu0
    %v644 = vpop.f32.mrb[0].mxu0
    %v645 = vadd.f32 %v525, %v644
    %v646 = vpop.f32.mrb[0].mxu0
    %647 = vmatprep.mubr.bf16.mxu0 0
    %648 = vmatmul.mubr.bf16.gmra.mrb[0].mxu0 %v501
    %v649 = vpop.f32.mrb[0].mxu0
    %v650 = vadd.f32 %v525, %v649
    %v651 = vpop.f32.mrb[0].mxu0
    %v652 = vpop.f32.mrb[0].mxu0
    %v653 = vadd.f32 %v525, %v652
    %v654 = vpop.f32.mrb[0].mxu0
    %655 = vmatprep.mubr.bf16.mxu0 0
    %656 = vmatmul.mubr.bf16.gmra.mrb[0].mxu0 %v502
    %v657 = vpop.f32.mrb[0].mxu0
    %v658 = vadd.f32 %v525, %v657
    %v659 = vpop.f32.mrb[0].mxu0
    %v660 = vpop.f32.mrb[0].mxu0
    %v661 = vadd.f32 %v525, %v660
    %v662 = vpop.f32.mrb[0].mxu0
    %663 = vmatprep.mubr.bf16.mxu0 0
    %664 = vmatmul.mubr.bf16.gmra.mrb[0].mxu0 %v503
    %v665 = vpop.f32.mrb[0].mxu0
    %v666 = vadd.f32 %v525, %v665
    %v667 = vpop.f32.mrb[0].mxu0
    %v668 = vpop.f32.mrb[0].mxu0
    %v669 = vadd.f32 %v525, %v668
    %v670 = vpop.f32.mrb[0].mxu0
    %671 = vdwg.mxu0
    %v672 = vmax.f32 %v610, 0.0
    %v673 = vmax.f32 %v613, 0.0
    %v674 = vmax.f32 %v618, 0.0
    %v675 = vmax.f32 %v621, 0.0
    %v676 = vmax.f32 %v626, 0.0
    %v677 = vmax.f32 %v629, 0.0
    %v678 = vmax.f32 %v634, 0.0
    %v679 = vmax.f32 %v637, 0.0
    %v680 = vmax.f32 %v642, 0.0
    %v681 = vmax.f32 %v645, 0.0
    %v682 = vmax.f32 %v650, 0.0
    %v683 = vmax.f32 %v653, 0.0
    %v684 = vmax.f32 %v658, 0.0
    %v685 = vmax.f32 %v661, 0.0
    %v686 = vmax.f32 %v666, 0.0
    %v687 = vmax.f32 %v669, 0.0
    %689 = vset.pattern.permute.xlu0 0
    %690 = vperm.xlu0 %689, %v131
    %v691 = vpop.permute.xlu0 %690
    %694 = vset.pattern.permute.xlu0 0
    %695 = vperm.xlu0 %694, %v132
    %v696 = vpop.permute.xlu0 %695
    %699 = vset.pattern.permute.xlu0 0
    %700 = vperm.xlu0 %699, %v133
    %v701 = vpop.permute.xlu0 %700
    %704 = vset.pattern.permute.xlu0 0
    %705 = vperm.xlu0 %704, %v134
    %v706 = vpop.permute.xlu0 %705
    %709 = vset.pattern.permute.xlu0 0
    %710 = vperm.xlu0 %709, %v135
    %v711 = vpop.permute.xlu0 %710
    %714 = vset.pattern.permute.xlu0 0
    %715 = vperm.xlu0 %714, %v136
    %v716 = vpop.permute.xlu0 %715
    %719 = vset.pattern.permute.xlu0 0
    %720 = vperm.xlu0 %719, %v137
    %v721 = vpop.permute.xlu0 %720
    %724 = vset.pattern.permute.xlu0 0
    %725 = vperm.xlu0 %724, %v138
    %v726 = vpop.permute.xlu0 %725
    %729 = vset.pattern.permute.xlu0 0
    %730 = vperm.xlu0 %729, %v139
    %v731 = vpop.permute.xlu0 %730
    %734 = vset.pattern.permute.xlu0 0
    %735 = vperm.xlu0 %734, %v140
    %v736 = vpop.permute.xlu0 %735
    %739 = vset.pattern.permute.xlu0 0
    %740 = vperm.xlu0 %739, %v141
    %v741 = vpop.permute.xlu0 %740
    %744 = vset.pattern.permute.xlu0 0
    %745 = vperm.xlu0 %744, %v142
    %v746 = vpop.permute.xlu0 %745
    %749 = vset.pattern.permute.xlu0 0
    %750 = vperm.xlu0 %749, %v143
    %v751 = vpop.permute.xlu0 %750
    %754 = vset.pattern.permute.xlu0 0
    %755 = vperm.xlu0 %754, %v144
    %v756 = vpop.permute.xlu0 %755
    %759 = vset.pattern.permute.xlu0 0
    %760 = vperm.xlu0 %759, %v145
    %v761 = vpop.permute.xlu0 %760
    %764 = vset.pattern.permute.xlu0 0
    %765 = vperm.xlu0 %764, %v146
    %v766 = vpop.permute.xlu0 %765
    %v768 = vmul.f32 %v691, %v672
    %v769 = vmul.f32 %v696, %v673
    %v770 = vmul.f32 %v701, %v674
    %v771 = vmul.f32 %v706, %v675
    %v772 = vmul.f32 %v711, %v676
    %v773 = vmul.f32 %v716, %v677
    %v774 = vmul.f32 %v721, %v678
    %v775 = vmul.f32 %v726, %v679
    %v776 = vmul.f32 %v731, %v680
    %v777 = vmul.f32 %v736, %v681
    %v778 = vmul.f32 %v741, %v682
    %v779 = vmul.f32 %v746, %v683
    %v780 = vmul.f32 %v751, %v684
    %v781 = vmul.f32 %v756, %v685
    %v782 = vmul.f32 %v761, %v686
    %v783 = vmul.f32 %v766, %v687
    %s784 = sld [smem:[#allocation6]]
    %v785 = vstv %s784
    %v786 = vmul.f32 %v785, %v768
    %v787 = vmul.f32 %v785, %v769
    %v788 = vmul.f32 %v785, %v770
    %v789 = vmul.f32 %v785, %v771
    %v790 = vmul.f32 %v785, %v772
    %v791 = vmul.f32 %v785, %v773
    %v792 = vmul.f32 %v785, %v774
    %v793 = vmul.f32 %v785, %v775
    %v794 = vmul.f32 %v785, %v776
    %v795 = vmul.f32 %v785, %v777
    %v796 = vmul.f32 %v785, %v778
    %v797 = vmul.f32 %v785, %v779
    %v798 = vmul.f32 %v785, %v780
    %v799 = vmul.f32 %v785, %v781
    %v800 = vmul.f32 %v785, %v782
    %v801 = vmul.f32 %v785, %v783
    %v802 = vpack.c.bf16 %v769, %v768
    %v803 = vpack.c.bf16 %v771, %v770
    %v804 = vpack.c.bf16 %v773, %v772
    %v805 = vpack.c.bf16 %v775, %v774
    %v806 = vpack.c.bf16 %v777, %v776
    %v807 = vpack.c.bf16 %v779, %v778
    %v808 = vpack.c.bf16 %v781, %v780
    %v809 = vpack.c.bf16 %v783, %v782
    %810 = vmatprep.subr.bf16.mxu0 0
    %811 = vmatpush1.bf16.msra.mxu0 %v802
    %812 = vmatprep.subr.bf16.mxu0 0
    %813 = vmatpush1.bf16.msra.mxu0 %v803
    %814 = vmatprep.subr.bf16.mxu0 0
    %815 = vmatpush1.bf16.msra.mxu0 %v804
    %816 = vmatprep.subr.bf16.mxu0 0
    %817 = vmatpush1.bf16.msra.mxu0 %v805
    %818 = vmatprep.subr.bf16.mxu0 0
    %819 = vmatpush1.bf16.msra.mxu0 %v806
    %820 = vmatprep.subr.bf16.mxu0 0
    %821 = vmatpush1.bf16.msra.mxu0 %v807
    %822 = vmatprep.subr.bf16.mxu0 0
    %823 = vmatpush1.bf16.msra.mxu0 %v808
    %824 = vmatprep.subr.bf16.mxu0 0
    %825 = vmatpush1.bf16.msra.mxu0 %v809
    %826 = vmatprep.subr.bf16.mxu0 0
    %827 = vmatpush1.bf16.msra.mxu0 0
    %828 = vmatprep.subr.bf16.mxu0 0
    %829 = vmatpush1.bf16.msra.mxu0 0
    %830 = vmatprep.subr.bf16.mxu0 0
    %831 = vmatpush1.bf16.msra.mxu0 0
    %832 = vmatprep.subr.bf16.mxu0 0
    %833 = vmatpush1.bf16.msra.mxu0 0
    %834 = vmatprep.subr.bf16.mxu0 0
    %835 = vmatpush1.bf16.msra.mxu0 0
    %836 = vmatprep.subr.bf16.mxu0 0
    %837 = vmatpush1.bf16.msra.mxu0 0
    %838 = vmatprep.subr.bf16.mxu0 0
    %839 = vmatpush1.bf16.msra.mxu0 0
    %840 = vmatprep.subr.bf16.mxu0 0
    %841 = vmatpush1.bf16.msra.mxu0 0
    %842 = vmatprep.mubr.bf16.mxu0 0
    %843 = vmatmul.mubr.bf16.gmra.mrb[0].mxu0 %v333
    %v844 = vpop.f32.mrb[0].mxu0
    %v845 = vadd.f32 0.0, %v844
    %v846 = vpop.f32.mrb[0].mxu0
    %v847 = vpop.f32.mrb[0].mxu0
    %v848 = vadd.f32 0.0, %v847
    %v849 = vpop.f32.mrb[0].mxu0
    %850 = vmatprep.mubr.bf16.mxu0 0
    %851 = vmatmul.mubr.bf16.gmra.mrb[0].mxu0 %v334
    %v852 = vpop.f32.mrb[0].mxu0
    %v853 = vadd.f32 0.0, %v852
    %v854 = vpop.f32.mrb[0].mxu0
    %v855 = vpop.f32.mrb[0].mxu0
    %v856 = vadd.f32 0.0, %v855
    %v857 = vpop.f32.mrb[0].mxu0
    %858 = vmatprep.mubr.bf16.mxu0 0
    %859 = vmatmul.mubr.bf16.gmra.mrb[0].mxu0 %v335
    %v860 = vpop.f32.mrb[0].mxu0
    %v861 = vadd.f32 0.0, %v860
    %v862 = vpop.f32.mrb[0].mxu0
    %v863 = vpop.f32.mrb[0].mxu0
    %v864 = vadd.f32 0.0, %v863
    %v865 = vpop.f32.mrb[0].mxu0
    %866 = vmatprep.mubr.bf16.mxu0 0
    %867 = vmatmul.mubr.bf16.gmra.mrb[0].mxu0 %v336
    %v868 = vpop.f32.mrb[0].mxu0
    %v869 = vadd.f32 0.0, %v868
    %v870 = vpop.f32.mrb[0].mxu0
    %v871 = vpop.f32.mrb[0].mxu0
    %v872 = vadd.f32 0.0, %v871
    %v873 = vpop.f32.mrb[0].mxu0
    %874 = vmatprep.mubr.bf16.mxu0 0
    %875 = vmatmul.mubr.bf16.gmra.mrb[0].mxu0 %v337
    %v876 = vpop.f32.mrb[0].mxu0
    %v877 = vadd.f32 0.0, %v876
    %v878 = vpop.f32.mrb[0].mxu0
    %v879 = vpop.f32.mrb[0].mxu0
    %v880 = vadd.f32 0.0, %v879
    %v881 = vpop.f32.mrb[0].mxu0
    %882 = vmatprep.mubr.bf16.mxu0 0
    %883 = vmatmul.mubr.bf16.gmra.mrb[0].mxu0 %v338
    %v884 = vpop.f32.mrb[0].mxu0
    %v885 = vadd.f32 0.0, %v884
    %v886 = vpop.f32.mrb[0].mxu0
    %v887 = vpop.f32.mrb[0].mxu0
    %v888 = vadd.f32 0.0, %v887
    %v889 = vpop.f32.mrb[0].mxu0
    %890 = vmatprep.mubr.bf16.mxu0 0
    %891 = vmatmul.mubr.bf16.gmra.mrb[0].mxu0 %v339
    %v892 = vpop.f32.mrb[0].mxu0
    %v893 = vadd.f32 0.0, %v892
    %v894 = vpop.f32.mrb[0].mxu0
    %v895 = vpop.f32.mrb[0].mxu0
    %v896 = vadd.f32 0.0, %v895
    %v897 = vpop.f32.mrb[0].mxu0
    %898 = vmatprep.mubr.bf16.mxu0 0
    %899 = vmatmul.mubr.bf16.gmra.mrb[0].mxu0 %v340
    %v900 = vpop.f32.mrb[0].mxu0
    %v901 = vadd.f32 0.0, %v900
    %v902 = vpop.f32.mrb[0].mxu0
    %v903 = vpop.f32.mrb[0].mxu0
    %v904 = vadd.f32 0.0, %v903
    %v905 = vpop.f32.mrb[0].mxu0
    %906 = vdwg.mxu0
    %s907 = sld [smem:[#allocation6 + $0x1]]
    %v908 = vstv %s907
    %v909 = vmul.f32 %v908, %v845
    %v910 = vmul.f32 %v908, %v848
    %v911 = vmul.f32 %v908, %v853
    %v912 = vmul.f32 %v908, %v856
    %v913 = vmul.f32 %v908, %v861
    %v914 = vmul.f32 %v908, %v864
    %v915 = vmul.f32 %v908, %v869
    %v916 = vmul.f32 %v908, %v872
    %v917 = vmul.f32 %v908, %v877
    %v918 = vmul.f32 %v908, %v880
    %v919 = vmul.f32 %v908, %v885
    %v920 = vmul.f32 %v908, %v888
    %v921 = vmul.f32 %v908, %v893
    %v922 = vmul.f32 %v908, %v896
    %v923 = vmul.f32 %v908, %v901
    %v924 = vmul.f32 %v908, %v904
    %v925 = vadd.f32 %v786, %v909
    %v926 = vadd.f32 %v787, %v910
    %v927 = vadd.f32 %v788, %v911
    %v928 = vadd.f32 %v789, %v912
    %v929 = vadd.f32 %v790, %v913
    %v930 = vadd.f32 %v791, %v914
    %v931 = vadd.f32 %v792, %v915
    %v932 = vadd.f32 %v793, %v916
    %v933 = vadd.f32 %v794, %v917
    %v934 = vadd.f32 %v795, %v918
    %v935 = vadd.f32 %v796, %v919
    %v936 = vadd.f32 %v797, %v920
    %v937 = vadd.f32 %v798, %v921
    %v938 = vadd.f32 %v799, %v922
    %v939 = vadd.f32 %v800, %v923
    %v940 = vadd.f32 %v801, %v924
    %v941 = vmul.f32 %v691, %v925
    %v942 = vmul.f32 %v696, %v926
    %v943 = vmul.f32 %v701, %v927
    %v944 = vmul.f32 %v706, %v928
    %v945 = vmul.f32 %v711, %v929
    %v946 = vmul.f32 %v716, %v930
    %v947 = vmul.f32 %v721, %v931
    %v948 = vmul.f32 %v726, %v932
    %v949 = vmul.f32 %v731, %v933
    %v950 = vmul.f32 %v736, %v934
    %v951 = vmul.f32 %v741, %v935
    %v952 = vmul.f32 %v746, %v936
    %v953 = vmul.f32 %v751, %v937
    %v954 = vmul.f32 %v756, %v938
    %v955 = vmul.f32 %v761, %v939
    %v956 = vmul.f32 %v766, %v940
    %v957 = vpack.c.bf16 %v942, %v941
    %v958 = vpack.c.bf16 %v944, %v943
    %v959 = vpack.c.bf16 %v946, %v945
    %v960 = vpack.c.bf16 %v948, %v947
    %v961 = vpack.c.bf16 %v950, %v949
    %v962 = vpack.c.bf16 %v952, %v951
    %v963 = vpack.c.bf16 %v954, %v953
    %v964 = vpack.c.bf16 %v956, %v955
    %v965 = vld [vmem:[%s8] sm:$0xf]
    %v966 = vld [vmem:[%s8 + $0x4] sm:$0xf]
    %v967 = vld [vmem:[%s8 + $0x8] sm:$0xf]
    %v968 = vld [vmem:[%s8 + $0xc] sm:$0xf]
    %v969 = vld [vmem:[%s8 + $0x10] sm:$0xf]
    %v970 = vld [vmem:[%s8 + $0x14] sm:$0xf]
    %v971 = vld [vmem:[%s8 + $0x18] sm:$0xf]
    %v972 = vld [vmem:[%s8 + $0x1c] sm:$0xf]
    %v973 = vld [vmem:[%s8 + $0x20] sm:$0xf]
    %v974 = vld [vmem:[%s8 + $0x24] sm:$0xf]
    %v975 = vld [vmem:[%s8 + $0x28] sm:$0xf]
    %v976 = vld [vmem:[%s8 + $0x2c] sm:$0xf]
    %v977 = vld [vmem:[%s8 + $0x30] sm:$0xf]
    %v978 = vld [vmem:[%s8 + $0x34] sm:$0xf]
    %v979 = vld [vmem:[%s8 + $0x38] sm:$0xf]
    %v980 = vld [vmem:[%s8 + $0x3c] sm:$0xf]
    %v981 = vld [vmem:[%s9] sm:$0x1]
    %v983 = vlaneseq
    %v984 = vshrl.u32 %v983, 7
    %v985 = vsub.s32 0, %v984
    %v986 = vrot.slane %v981, %v985
    %v1004 = vunpack.c.l.b16 %v965
    %v1005 = vunpack.c.l.b16 %v966
    %v1006 = vunpack.c.l.b16 %v967
    %v1007 = vunpack.c.l.b16 %v968
    %v1008 = vunpack.c.l.b16 %v969
    %v1009 = vunpack.c.l.b16 %v970
    %v1010 = vunpack.c.l.b16 %v971
    %v1011 = vunpack.c.l.b16 %v972
    %v1012 = vunpack.c.l.b16 %v973
    %v1013 = vunpack.c.l.b16 %v974
    %v1014 = vunpack.c.l.b16 %v975
    %v1015 = vunpack.c.l.b16 %v976
    %v1016 = vunpack.c.l.b16 %v977
    %v1017 = vunpack.c.l.b16 %v978
    %v1018 = vunpack.c.l.b16 %v979
    %v1019 = vunpack.c.l.b16 %v980
    %v1020 = vpack.c.b16 %v1005, %v1004
    %v1021 = vpack.c.b16 %v1007, %v1006
    %v1022 = vpack.c.b16 %v1009, %v1008
    %v1023 = vpack.c.b16 %v1011, %v1010
    %v1024 = vpack.c.b16 %v1013, %v1012
    %v1025 = vpack.c.b16 %v1015, %v1014
    %v1026 = vpack.c.b16 %v1017, %v1016
    %v1027 = vpack.c.b16 %v1019, %v1018
    %1036 = vmatprep.subr.bf16.mxu0 0
    %1037 = vmatpush1.bf16.msra.mxu0 %v1020
    %1038 = vmatprep.subr.bf16.mxu0 0
    %1039 = vmatpush1.bf16.msra.mxu0 %v1021
    %1040 = vmatprep.subr.bf16.mxu0 0
    %1041 = vmatpush1.bf16.msra.mxu0 %v1022
    %1042 = vmatprep.subr.bf16.mxu0 0
    %1043 = vmatpush1.bf16.msra.mxu0 %v1023
    %1044 = vmatprep.subr.bf16.mxu0 0
    %1045 = vmatpush1.bf16.msra.mxu0 %v1024
    %1046 = vmatprep.subr.bf16.mxu0 0
    %1047 = vmatpush1.bf16.msra.mxu0 %v1025
    %1048 = vmatprep.subr.bf16.mxu0 0
    %1049 = vmatpush1.bf16.msra.mxu0 %v1026
    %1050 = vmatprep.subr.bf16.mxu0 0
    %1051 = vmatpush1.bf16.msra.mxu0 %v1027
    %1052 = vmatprep.subr.bf16.mxu0 0
    %1053 = vmatpush1.bf16.msra.mxu0 0
    %1054 = vmatprep.subr.bf16.mxu0 0
    %1055 = vmatpush1.bf16.msra.mxu0 0
    %1056 = vmatprep.subr.bf16.mxu0 0
    %1057 = vmatpush1.bf16.msra.mxu0 0
    %1058 = vmatprep.subr.bf16.mxu0 0
    %1059 = vmatpush1.bf16.msra.mxu0 0
    %1060 = vmatprep.subr.bf16.mxu0 0
    %1061 = vmatpush1.bf16.msra.mxu0 0
    %1062 = vmatprep.subr.bf16.mxu0 0
    %1063 = vmatpush1.bf16.msra.mxu0 0
    %1064 = vmatprep.subr.bf16.mxu0 0
    %1065 = vmatpush1.bf16.msra.mxu0 0
    %1066 = vmatprep.subr.bf16.mxu0 0
    %1067 = vmatpush1.bf16.msra.mxu0 0
    %1068 = vmatprep.mubr.bf16.mxu0 0
    %1069 = vmatmul.mubr.bf16.gmra.mrb[0].mxu0 %v957
    %v1070 = vpop.f32.mrb[0].mxu0
    %v1071 = vadd.f32 %v986, %v1070
    %v1072 = vpop.f32.mrb[0].mxu0
    %v1073 = vpop.f32.mrb[0].mxu0
    %v1074 = vadd.f32 %v986, %v1073
    %v1075 = vpop.f32.mrb[0].mxu0
    %1076 = vmatprep.mubr.bf16.mxu0 0
    %1077 = vmatmul.mubr.bf16.gmra.mrb[0].mxu0 %v958
    %v1078 = vpop.f32.mrb[0].mxu0
    %v1079 = vadd.f32 %v986, %v1078
    %v1080 = vpop.f32.mrb[0].mxu0
    %v1081 = vpop.f32.mrb[0].mxu0
    %v1082 = vadd.f32 %v986, %v1081
    %v1083 = vpop.f32.mrb[0].mxu0
    %1084 = vmatprep.mubr.bf16.mxu0 0
    %1085 = vmatmul.mubr.bf16.gmra.mrb[0].mxu0 %v959
    %v1086 = vpop.f32.mrb[0].mxu0
    %v1087 = vadd.f32 %v986, %v1086
    %v1088 = vpop.f32.mrb[0].mxu0
    %v1089 = vpop.f32.mrb[0].mxu0
    %v1090 = vadd.f32 %v986, %v1089
    %v1091 = vpop.f32.mrb[0].mxu0
    %1092 = vmatprep.mubr.bf16.mxu0 0
    %1093 = vmatmul.mubr.bf16.gmra.mrb[0].mxu0 %v960
    %v1094 = vpop.f32.mrb[0].mxu0
    %v1095 = vadd.f32 %v986, %v1094
    %v1096 = vpop.f32.mrb[0].mxu0
    %v1097 = vpop.f32.mrb[0].mxu0
    %v1098 = vadd.f32 %v986, %v1097
    %v1099 = vpop.f32.mrb[0].mxu0
    %1100 = vmatprep.mubr.bf16.mxu0 0
    %1101 = vmatmul.mubr.bf16.gmra.mrb[0].mxu0 %v961
    %v1102 = vpop.f32.mrb[0].mxu0
    %v1103 = vadd.f32 %v986, %v1102
    %v1104 = vpop.f32.mrb[0].mxu0
    %v1105 = vpop.f32.mrb[0].mxu0
    %v1106 = vadd.f32 %v986, %v1105
    %v1107 = vpop.f32.mrb[0].mxu0
    %1108 = vmatprep.mubr.bf16.mxu0 0
    %1109 = vmatmul.mubr.bf16.gmra.mrb[0].mxu0 %v962
    %v1110 = vpop.f32.mrb[0].mxu0
    %v1111 = vadd.f32 %v986, %v1110
    %v1112 = vpop.f32.mrb[0].mxu0
    %v1113 = vpop.f32.mrb[0].mxu0
    %v1114 = vadd.f32 %v986, %v1113
    %v1115 = vpop.f32.mrb[0].mxu0
    %1116 = vmatprep.mubr.bf16.mxu0 0
    %1117 = vmatmul.mubr.bf16.gmra.mrb[0].mxu0 %v963
    %v1118 = vpop.f32.mrb[0].mxu0
    %v1119 = vadd.f32 %v986, %v1118
    %v1120 = vpop.f32.mrb[0].mxu0
    %v1121 = vpop.f32.mrb[0].mxu0
    %v1122 = vadd.f32 %v986, %v1121
    %v1123 = vpop.f32.mrb[0].mxu0
    %1124 = vmatprep.mubr.bf16.mxu0 0
    %1125 = vmatmul.mubr.bf16.gmra.mrb[0].mxu0 %v964
    %v1126 = vpop.f32.mrb[0].mxu0
    %v1127 = vadd.f32 %v986, %v1126
    %v1128 = vpop.f32.mrb[0].mxu0
    %v1129 = vpop.f32.mrb[0].mxu0
    %v1130 = vadd.f32 %v986, %v1129
    %v1131 = vpop.f32.mrb[0].mxu0
    %1132 = vdwg.mxu0
    %v1133 = vpack.c.bf16 %v1074, %v1071
    %v1134 = vpack.c.bf16 %v1082, %v1079
    %v1135 = vpack.c.bf16 %v1090, %v1087
    %v1136 = vpack.c.bf16 %v1098, %v1095
    %v1137 = vpack.c.bf16 %v1106, %v1103
    %v1138 = vpack.c.bf16 %v1114, %v1111
    %v1139 = vpack.c.bf16 %v1122, %v1119
    %v1140 = vpack.c.bf16 %v1130, %v1127
    %v1141 = vld [vmem:[#allocation8] sm:$0xf]
    %v1142 = vld [vmem:[#allocation8 + $0x4] sm:$0xf]
    %v1143 = vld [vmem:[#allocation8 + $0x8] sm:$0xf]
    %v1144 = vld [vmem:[#allocation8 + $0xc] sm:$0xf]
    %v1145 = vld [vmem:[#allocation8 + $0x10] sm:$0xf]
    %v1146 = vld [vmem:[#allocation8 + $0x14] sm:$0xf]
    %v1147 = vld [vmem:[#allocation8 + $0x18] sm:$0xf]
    %v1148 = vld [vmem:[#allocation8 + $0x1c] sm:$0xf]
    %v1149 = vld [vmem:[#allocation8 + $0x20] sm:$0xf]
    %v1150 = vld [vmem:[#allocation8 + $0x24] sm:$0xf]
    %v1151 = vld [vmem:[#allocation8 + $0x28] sm:$0xf]
    %v1152 = vld [vmem:[#allocation8 + $0x2c] sm:$0xf]
    %v1153 = vld [vmem:[#allocation8 + $0x30] sm:$0xf]
    %v1154 = vld [vmem:[#allocation8 + $0x34] sm:$0xf]
    %v1155 = vld [vmem:[#allocation8 + $0x38] sm:$0xf]
    %v1156 = vld [vmem:[#allocation8 + $0x3c] sm:$0xf]
    %v1173 = vunpack.c.l.b16 %v1141
    %v1174 = vunpack.c.l.b16 %v1142
    %v1175 = vunpack.c.l.b16 %v1143
    %v1176 = vunpack.c.l.b16 %v1144
    %v1177 = vunpack.c.l.b16 %v1145
    %v1178 = vunpack.c.l.b16 %v1146
    %v1179 = vunpack.c.l.b16 %v1147
    %v1180 = vunpack.c.l.b16 %v1148
    %v1181 = vunpack.c.l.b16 %v1149
    %v1182 = vunpack.c.l.b16 %v1150
    %v1183 = vunpack.c.l.b16 %v1151
    %v1184 = vunpack.c.l.b16 %v1152
    %v1185 = vunpack.c.l.b16 %v1153
    %v1186 = vunpack.c.l.b16 %v1154
    %v1187 = vunpack.c.l.b16 %v1155
    %v1188 = vunpack.c.l.b16 %v1156
    %v1189 = vpack.c.b16 %v1174, %v1173
    %v1190 = vpack.c.b16 %v1176, %v1175
    %v1191 = vpack.c.b16 %v1178, %v1177
    %v1192 = vpack.c.b16 %v1180, %v1179
    %v1193 = vpack.c.b16 %v1182, %v1181
    %v1194 = vpack.c.b16 %v1184, %v1183
    %v1195 = vpack.c.b16 %v1186, %v1185
    %v1196 = vpack.c.b16 %v1188, %v1187
    %1205 = vmatprep.subr.bf16.mxu0 0
    %1206 = vmatpush1.bf16.msra.mxu0 %v1189
    %1207 = vmatprep.subr.bf16.mxu0 0
    %1208 = vmatpush1.bf16.msra.mxu0 %v1190
    %1209 = vmatprep.subr.bf16.mxu0 0
    %1210 = vmatpush1.bf16.msra.mxu0 %v1191
    %1211 = vmatprep.subr.bf16.mxu0 0
    %1212 = vmatpush1.bf16.msra.mxu0 %v1192
    %1213 = vmatprep.subr.bf16.mxu0 0
    %1214 = vmatpush1.bf16.msra.mxu0 %v1193
    %1215 = vmatprep.subr.bf16.mxu0 0
    %1216 = vmatpush1.bf16.msra.mxu0 %v1194
    %1217 = vmatprep.subr.bf16.mxu0 0
    %1218 = vmatpush1.bf16.msra.mxu0 %v1195
    %1219 = vmatprep.subr.bf16.mxu0 0
    %1220 = vmatpush1.bf16.msra.mxu0 %v1196
    %1221 = vmatprep.subr.bf16.mxu0 0
    %1222 = vmatpush1.bf16.msra.mxu0 0
    %1223 = vmatprep.subr.bf16.mxu0 0
    %1224 = vmatpush1.bf16.msra.mxu0 0
    %1225 = vmatprep.subr.bf16.mxu0 0
    %1226 = vmatpush1.bf16.msra.mxu0 0
    %1227 = vmatprep.subr.bf16.mxu0 0
    %1228 = vmatpush1.bf16.msra.mxu0 0
    %1229 = vmatprep.subr.bf16.mxu0 0
    %1230 = vmatpush1.bf16.msra.mxu0 0
    %1231 = vmatprep.subr.bf16.mxu0 0
    %1232 = vmatpush1.bf16.msra.mxu0 0
    %1233 = vmatprep.subr.bf16.mxu0 0
    %1234 = vmatpush1.bf16.msra.mxu0 0
    %1235 = vmatprep.subr.bf16.mxu0 0
    %1236 = vmatpush1.bf16.msra.mxu0 0
    %1237 = vmatprep.mubr.bf16.mxu0 0
    %1238 = vmatmul.mubr.bf16.gmra.mrb[0].mxu0 %v1133
    %v1239 = vpop.f32.mrb[0].mxu0
    %v1240 = vadd.f32 0.0, %v1239
    %v1241 = vpop.f32.mrb[0].mxu0
    %v1242 = vpop.f32.mrb[0].mxu0
    %v1243 = vadd.f32 0.0, %v1242
    %v1244 = vpop.f32.mrb[0].mxu0
    %1245 = vmatprep.mubr.bf16.mxu0 0
    %1246 = vmatmul.mubr.bf16.gmra.mrb[0].mxu0 %v1134
    %v1247 = vpop.f32.mrb[0].mxu0
    %v1248 = vadd.f32 0.0, %v1247
    %v1249 = vpop.f32.mrb[0].mxu0
    %v1250 = vpop.f32.mrb[0].mxu0
    %v1251 = vadd.f32 0.0, %v1250
    %v1252 = vpop.f32.mrb[0].mxu0
    %1253 = vmatprep.mubr.bf16.mxu0 0
    %1254 = vmatmul.mubr.bf16.gmra.mrb[0].mxu0 %v1135
    %v1255 = vpop.f32.mrb[0].mxu0
    %v1256 = vadd.f32 0.0, %v1255
    %v1257 = vpop.f32.mrb[0].mxu0
    %v1258 = vpop.f32.mrb[0].mxu0
    %v1259 = vadd.f32 0.0, %v1258
    %v1260 = vpop.f32.mrb[0].mxu0
    %1261 = vmatprep.mubr.bf16.mxu0 0
    %1262 = vmatmul.mubr.bf16.gmra.mrb[0].mxu0 %v1136
    %v1263 = vpop.f32.mrb[0].mxu0
    %v1264 = vadd.f32 0.0, %v1263
    %v1265 = vpop.f32.mrb[0].mxu0
    %v1266 = vpop.f32.mrb[0].mxu0
    %v1267 = vadd.f32 0.0, %v1266
    %v1268 = vpop.f32.mrb[0].mxu0
    %1269 = vmatprep.mubr.bf16.mxu0 0
    %1270 = vmatmul.mubr.bf16.gmra.mrb[0].mxu0 %v1137
    %v1271 = vpop.f32.mrb[0].mxu0
    %v1272 = vadd.f32 0.0, %v1271
    %v1273 = vpop.f32.mrb[0].mxu0
    %v1274 = vpop.f32.mrb[0].mxu0
    %v1275 = vadd.f32 0.0, %v1274
    %v1276 = vpop.f32.mrb[0].mxu0
    %1277 = vmatprep.mubr.bf16.mxu0 0
    %1278 = vmatmul.mubr.bf16.gmra.mrb[0].mxu0 %v1138
    %v1279 = vpop.f32.mrb[0].mxu0
    %v1280 = vadd.f32 0.0, %v1279
    %v1281 = vpop.f32.mrb[0].mxu0
    %v1282 = vpop.f32.mrb[0].mxu0
    %v1283 = vadd.f32 0.0, %v1282
    %v1284 = vpop.f32.mrb[0].mxu0
    %1285 = vmatprep.mubr.bf16.mxu0 0
    %1286 = vmatmul.mubr.bf16.gmra.mrb[0].mxu0 %v1139
    %v1287 = vpop.f32.mrb[0].mxu0
    %v1288 = vadd.f32 0.0, %v1287
    %v1289 = vpop.f32.mrb[0].mxu0
    %v1290 = vpop.f32.mrb[0].mxu0
    %v1291 = vadd.f32 0.0, %v1290
    %v1292 = vpop.f32.mrb[0].mxu0
    %1293 = vmatprep.mubr.bf16.mxu0 0
    %1294 = vmatmul.mubr.bf16.gmra.mrb[0].mxu0 %v1140
    %v1295 = vpop.f32.mrb[0].mxu0
    %v1296 = vadd.f32 0.0, %v1295
    %v1297 = vpop.f32.mrb[0].mxu0
    %v1298 = vpop.f32.mrb[0].mxu0
    %v1299 = vadd.f32 0.0, %v1298
    %v1300 = vpop.f32.mrb[0].mxu0
    %1301 = vdwg.mxu0
    %v1302 = vpack.c.bf16 %v1243, %v1240
    %v1303 = vpack.c.bf16 %v1251, %v1248
    %v1304 = vpack.c.bf16 %v1259, %v1256
    %v1305 = vpack.c.bf16 %v1267, %v1264
    %v1306 = vpack.c.bf16 %v1275, %v1272
    %v1307 = vpack.c.bf16 %v1283, %v1280
    %v1308 = vpack.c.bf16 %v1291, %v1288
    %v1309 = vpack.c.bf16 %v1299, %v1296
    %v1318 = vunpack.c.l.b16 %v1302
    %v1319 = vunpack.c.h.b16 %v1302
    %v1320 = vunpack.c.l.b16 %v1303
    %v1321 = vunpack.c.h.b16 %v1303
    %v1322 = vunpack.c.l.b16 %v1304
    %v1323 = vunpack.c.h.b16 %v1304
    %v1324 = vunpack.c.l.b16 %v1305
    %v1325 = vunpack.c.h.b16 %v1305
    %v1326 = vunpack.c.l.b16 %v1306
    %v1327 = vunpack.c.h.b16 %v1306
    %v1328 = vunpack.c.l.b16 %v1307
    %v1329 = vunpack.c.h.b16 %v1307
    %v1330 = vunpack.c.l.b16 %v1308
    %v1331 = vunpack.c.h.b16 %v1308
    %v1332 = vunpack.c.l.b16 %v1309
    %v1333 = vunpack.c.h.b16 %v1309
    %v1334 = vpack.c.b16 %v1318, %v1318
    %v1335 = vpack.c.b16 %v1319, %v1319
    %v1336 = vpack.c.b16 %v1320, %v1320
    %v1337 = vpack.c.b16 %v1321, %v1321
    %v1338 = vpack.c.b16 %v1322, %v1322
    %v1339 = vpack.c.b16 %v1323, %v1323
    %v1340 = vpack.c.b16 %v1324, %v1324
    %v1341 = vpack.c.b16 %v1325, %v1325
    %v1342 = vpack.c.b16 %v1326, %v1326
    %v1343 = vpack.c.b16 %v1327, %v1327
    %v1344 = vpack.c.b16 %v1328, %v1328
    %v1345 = vpack.c.b16 %v1329, %v1329
    %v1346 = vpack.c.b16 %v1330, %v1330
    %v1347 = vpack.c.b16 %v1331, %v1331
    %v1348 = vpack.c.b16 %v1332, %v1332
    %v1349 = vpack.c.b16 %v1333, %v1333
    %1366 = vst [vmem:[#allocation11] sm:$0xf] %v1334
    %1367 = vst [vmem:[#allocation11 + $0x4] sm:$0xf] %v1335
    %1368 = vst [vmem:[#allocation11 + $0x8] sm:$0xf] %v1336
    %1369 = vst [vmem:[#allocation11 + $0xc] sm:$0xf] %v1337
    %1370 = vst [vmem:[#allocation11 + $0x10] sm:$0xf] %v1338
    %1371 = vst [vmem:[#allocation11 + $0x14] sm:$0xf] %v1339
    %1372 = vst [vmem:[#allocation11 + $0x18] sm:$0xf] %v1340
    %1373 = vst [vmem:[#allocation11 + $0x1c] sm:$0xf] %v1341
    %1374 = vst [vmem:[#allocation11 + $0x20] sm:$0xf] %v1342
    %1375 = vst [vmem:[#allocation11 + $0x24] sm:$0xf] %v1343
    %1376 = vst [vmem:[#allocation11 + $0x28] sm:$0xf] %v1344
    %1377 = vst [vmem:[#allocation11 + $0x2c] sm:$0xf] %v1345
    %1378 = vst [vmem:[#allocation11 + $0x30] sm:$0xf] %v1346
    %1379 = vst [vmem:[#allocation11 + $0x34] sm:$0xf] %v1347
    %1380 = vst [vmem:[#allocation11 + $0x38] sm:$0xf] %v1348
    %1381 = vst [vmem:[#allocation11 + $0x3c] sm:$0xf] %v1349
    %v1382 = vld [vmem:[#allocation9] sm:$0xf]
    %v1383 = vld [vmem:[#allocation9 + $0x4] sm:$0xf]
    %v1384 = vld [vmem:[#allocation9 + $0x8] sm:$0xf]
    %v1385 = vld [vmem:[#allocation9 + $0xc] sm:$0xf]
    %v1386 = vld [vmem:[#allocation9 + $0x10] sm:$0xf]
    %v1387 = vld [vmem:[#allocation9 + $0x14] sm:$0xf]
    %v1388 = vld [vmem:[#allocation9 + $0x18] sm:$0xf]
    %v1389 = vld [vmem:[#allocation9 + $0x1c] sm:$0xf]
    %v1390 = vld [vmem:[#allocation9 + $0x20] sm:$0xf]
    %v1391 = vld [vmem:[#allocation9 + $0x24] sm:$0xf]
    %v1392 = vld [vmem:[#allocation9 + $0x28] sm:$0xf]
    %v1393 = vld [vmem:[#allocation9 + $0x2c] sm:$0xf]
    %v1394 = vld [vmem:[#allocation9 + $0x30] sm:$0xf]
    %v1395 = vld [vmem:[#allocation9 + $0x34] sm:$0xf]
    %v1396 = vld [vmem:[#allocation9 + $0x38] sm:$0xf]
    %v1397 = vld [vmem:[#allocation9 + $0x3c] sm:$0xf]
    %v1414 = vunpack.c.l.b16 %v1382
    %v1415 = vunpack.c.l.b16 %v1383
    %v1416 = vunpack.c.l.b16 %v1384
    %v1417 = vunpack.c.l.b16 %v1385
    %v1418 = vunpack.c.l.b16 %v1386
    %v1419 = vunpack.c.l.b16 %v1387
    %v1420 = vunpack.c.l.b16 %v1388
    %v1421 = vunpack.c.l.b16 %v1389
    %v1422 = vunpack.c.l.b16 %v1390
    %v1423 = vunpack.c.l.b16 %v1391
    %v1424 = vunpack.c.l.b16 %v1392
    %v1425 = vunpack.c.l.b16 %v1393
    %v1426 = vunpack.c.l.b16 %v1394
    %v1427 = vunpack.c.l.b16 %v1395
    %v1428 = vunpack.c.l.b16 %v1396
    %v1429 = vunpack.c.l.b16 %v1397
    %v1430 = vpack.c.b16 %v1415, %v1414
    %v1431 = vpack.c.b16 %v1417, %v1416
    %v1432 = vpack.c.b16 %v1419, %v1418
    %v1433 = vpack.c.b16 %v1421, %v1420
    %v1434 = vpack.c.b16 %v1423, %v1422
    %v1435 = vpack.c.b16 %v1425, %v1424
    %v1436 = vpack.c.b16 %v1427, %v1426
    %v1437 = vpack.c.b16 %v1429, %v1428
    %1446 = vmatprep.subr.bf16.mxu0 0
    %1447 = vmatpush1.bf16.msra.mxu0 %v1430
    %1448 = vmatprep.subr.bf16.mxu0 0
    %1449 = vmatpush1.bf16.msra.mxu0 %v1431
    %1450 = vmatprep.subr.bf16.mxu0 0
    %1451 = vmatpush1.bf16.msra.mxu0 %v1432
    %1452 = vmatprep.subr.bf16.mxu0 0
    %1453 = vmatpush1.bf16.msra.mxu0 %v1433
    %1454 = vmatprep.subr.bf16.mxu0 0
    %1455 = vmatpush1.bf16.msra.mxu0 %v1434
    %1456 = vmatprep.subr.bf16.mxu0 0
    %1457 = vmatpush1.bf16.msra.mxu0 %v1435
    %1458 = vmatprep.subr.bf16.mxu0 0
    %1459 = vmatpush1.bf16.msra.mxu0 %v1436
    %1460 = vmatprep.subr.bf16.mxu0 0
    %1461 = vmatpush1.bf16.msra.mxu0 %v1437
    %1462 = vmatprep.subr.bf16.mxu0 0
    %1463 = vmatpush1.bf16.msra.mxu0 0
    %1464 = vmatprep.subr.bf16.mxu0 0
    %1465 = vmatpush1.bf16.msra.mxu0 0
    %1466 = vmatprep.subr.bf16.mxu0 0
    %1467 = vmatpush1.bf16.msra.mxu0 0
    %1468 = vmatprep.subr.bf16.mxu0 0
    %1469 = vmatpush1.bf16.msra.mxu0 0
    %1470 = vmatprep.subr.bf16.mxu0 0
    %1471 = vmatpush1.bf16.msra.mxu0 0
    %1472 = vmatprep.subr.bf16.mxu0 0
    %1473 = vmatpush1.bf16.msra.mxu0 0
    %1474 = vmatprep.subr.bf16.mxu0 0
    %1475 = vmatpush1.bf16.msra.mxu0 0
    %1476 = vmatprep.subr.bf16.mxu0 0
    %1477 = vmatpush1.bf16.msra.mxu0 0
    %1478 = vmatprep.mubr.bf16.mxu0 0
    %1479 = vmatmul.mubr.bf16.gmra.mrb[0].mxu0 %v1133
    %v1480 = vpop.f32.mrb[0].mxu0
    %v1481 = vadd.f32 0.0, %v1480
    %v1482 = vpop.f32.mrb[0].mxu0
    %v1483 = vpop.f32.mrb[0].mxu0
    %v1484 = vadd.f32 0.0, %v1483
    %v1485 = vpop.f32.mrb[0].mxu0
    %1486 = vmatprep.mubr.bf16.mxu0 0
    %1487 = vmatmul.mubr.bf16.gmra.mrb[0].mxu0 %v1134
    %v1488 = vpop.f32.mrb[0].mxu0
    %v1489 = vadd.f32 0.0, %v1488
    %v1490 = vpop.f32.mrb[0].mxu0
    %v1491 = vpop.f32.mrb[0].mxu0
    %v1492 = vadd.f32 0.0, %v1491
    %v1493 = vpop.f32.mrb[0].mxu0
    %1494 = vmatprep.mubr.bf16.mxu0 0
    %1495 = vmatmul.mubr.bf16.gmra.mrb[0].mxu0 %v1135
    %v1496 = vpop.f32.mrb[0].mxu0
    %v1497 = vadd.f32 0.0, %v1496
    %v1498 = vpop.f32.mrb[0].mxu0
    %v1499 = vpop.f32.mrb[0].mxu0
    %v1500 = vadd.f32 0.0, %v1499
    %v1501 = vpop.f32.mrb[0].mxu0
    %1502 = vmatprep.mubr.bf16.mxu0 0
    %1503 = vmatmul.mubr.bf16.gmra.mrb[0].mxu0 %v1136
    %v1504 = vpop.f32.mrb[0].mxu0
    %v1505 = vadd.f32 0.0, %v1504
    %v1506 = vpop.f32.mrb[0].mxu0
    %v1507 = vpop.f32.mrb[0].mxu0
    %v1508 = vadd.f32 0.0, %v1507
    %v1509 = vpop.f32.mrb[0].mxu0
    %1510 = vmatprep.mubr.bf16.mxu0 0
    %1511 = vmatmul.mubr.bf16.gmra.mrb[0].mxu0 %v1137
    %v1512 = vpop.f32.mrb[0].mxu0
    %v1513 = vadd.f32 0.0, %v1512
    %v1514 = vpop.f32.mrb[0].mxu0
    %v1515 = vpop.f32.mrb[0].mxu0
    %v1516 = vadd.f32 0.0, %v1515
    %v1517 = vpop.f32.mrb[0].mxu0
    %1518 = vmatprep.mubr.bf16.mxu0 0
    %1519 = vmatmul.mubr.bf16.gmra.mrb[0].mxu0 %v1138
    %v1520 = vpop.f32.mrb[0].mxu0
    %v1521 = vadd.f32 0.0, %v1520
    %v1522 = vpop.f32.mrb[0].mxu0
    %v1523 = vpop.f32.mrb[0].mxu0
    %v1524 = vadd.f32 0.0, %v1523
    %v1525 = vpop.f32.mrb[0].mxu0
    %1526 = vmatprep.mubr.bf16.mxu0 0
    %1527 = vmatmul.mubr.bf16.gmra.mrb[0].mxu0 %v1139
    %v1528 = vpop.f32.mrb[0].mxu0
    %v1529 = vadd.f32 0.0, %v1528
    %v1530 = vpop.f32.mrb[0].mxu0
    %v1531 = vpop.f32.mrb[0].mxu0
    %v1532 = vadd.f32 0.0, %v1531
    %v1533 = vpop.f32.mrb[0].mxu0
    %1534 = vmatprep.mubr.bf16.mxu0 0
    %1535 = vmatmul.mubr.bf16.gmra.mrb[0].mxu0 %v1140
    %v1536 = vpop.f32.mrb[0].mxu0
    %v1537 = vadd.f32 0.0, %v1536
    %v1538 = vpop.f32.mrb[0].mxu0
    %v1539 = vpop.f32.mrb[0].mxu0
    %v1540 = vadd.f32 0.0, %v1539
    %v1541 = vpop.f32.mrb[0].mxu0
    %1542 = vdwg.mxu0
    %v1543 = vpack.c.bf16 %v1484, %v1481
    %v1544 = vpack.c.bf16 %v1492, %v1489
    %v1545 = vpack.c.bf16 %v1500, %v1497
    %v1546 = vpack.c.bf16 %v1508, %v1505
    %v1547 = vpack.c.bf16 %v1516, %v1513
    %v1548 = vpack.c.bf16 %v1524, %v1521
    %v1549 = vpack.c.bf16 %v1532, %v1529
    %v1550 = vpack.c.bf16 %v1540, %v1537
    %v1559 = vunpack.c.l.b16 %v1543
    %v1560 = vunpack.c.h.b16 %v1543
    %v1561 = vunpack.c.l.b16 %v1544
    %v1562 = vunpack.c.h.b16 %v1544
    %v1563 = vunpack.c.l.b16 %v1545
    %v1564 = vunpack.c.h.b16 %v1545
    %v1565 = vunpack.c.l.b16 %v1546
    %v1566 = vunpack.c.h.b16 %v1546
    %v1567 = vunpack.c.l.b16 %v1547
    %v1568 = vunpack.c.h.b16 %v1547
    %v1569 = vunpack.c.l.b16 %v1548
    %v1570 = vunpack.c.h.b16 %v1548
    %v1571 = vunpack.c.l.b16 %v1549
    %v1572 = vunpack.c.h.b16 %v1549
    %v1573 = vunpack.c.l.b16 %v1550
    %v1574 = vunpack.c.h.b16 %v1550
    %v1575 = vpack.c.b16 %v1559, %v1559
    %v1576 = vpack.c.b16 %v1560, %v1560
    %v1577 = vpack.c.b16 %v1561, %v1561
    %v1578 = vpack.c.b16 %v1562, %v1562
    %v1579 = vpack.c.b16 %v1563, %v1563
    %v1580 = vpack.c.b16 %v1564, %v1564
    %v1581 = vpack.c.b16 %v1565, %v1565
    %v1582 = vpack.c.b16 %v1566, %v1566
    %v1583 = vpack.c.b16 %v1567, %v1567
    %v1584 = vpack.c.b16 %v1568, %v1568
    %v1585 = vpack.c.b16 %v1569, %v1569
    %v1586 = vpack.c.b16 %v1570, %v1570
    %v1587 = vpack.c.b16 %v1571, %v1571
    %v1588 = vpack.c.b16 %v1572, %v1572
    %v1589 = vpack.c.b16 %v1573, %v1573
    %v1590 = vpack.c.b16 %v1574, %v1574
    %1607 = vst [vmem:[#allocation12] sm:$0xf] %v1575
    %1608 = vst [vmem:[#allocation12 + $0x4] sm:$0xf] %v1576
    %1609 = vst [vmem:[#allocation12 + $0x8] sm:$0xf] %v1577
    %1610 = vst [vmem:[#allocation12 + $0xc] sm:$0xf] %v1578
    %1611 = vst [vmem:[#allocation12 + $0x10] sm:$0xf] %v1579
    %1612 = vst [vmem:[#allocation12 + $0x14] sm:$0xf] %v1580
    %1613 = vst [vmem:[#allocation12 + $0x18] sm:$0xf] %v1581
    %1614 = vst [vmem:[#allocation12 + $0x1c] sm:$0xf] %v1582
    %1615 = vst [vmem:[#allocation12 + $0x20] sm:$0xf] %v1583
    %1616 = vst [vmem:[#allocation12 + $0x24] sm:$0xf] %v1584
    %1617 = vst [vmem:[#allocation12 + $0x28] sm:$0xf] %v1585
    %1618 = vst [vmem:[#allocation12 + $0x2c] sm:$0xf] %v1586
    %1619 = vst [vmem:[#allocation12 + $0x30] sm:$0xf] %v1587
    %1620 = vst [vmem:[#allocation12 + $0x34] sm:$0xf] %v1588
    %1621 = vst [vmem:[#allocation12 + $0x38] sm:$0xf] %v1589
    %1622 = vst [vmem:[#allocation12 + $0x3c] sm:$0xf] %v1590
    // Predicated region
    $region66: #{tpu_custom_call.1} parent=1 // pred_check
      _
    $region67: #{tpu_custom_call.1} parent=1 // pred_check_branch
      %1624 = sbr.rel (0) target = $region69
    $region68: #{tpu_custom_call.1} parent=1 // pred_region
      %s1626 = ssub.s32 1024, 1024
      %1627 = vsyncadd [#allocation4], %s1626
      %s1628 = sshll.u32 [#allocation11], 4
      %s1629 = int_to_ptr.vmem [resolvable:$true] %s1628
      %1634 = dma.vmem_to_hbm [thread:$0]  %s1629, 1024, %s12, [#allocation4], 64, 64, 4
    $region69: #{tpu_custom_call.1} parent=1 // pred_fallthru
      _
    // Predicated region
    $region70: #{tpu_custom_call.1} parent=1 // pred_check
      _
    $region71: #{tpu_custom_call.1} parent=1 // pred_check_branch
      %1636 = sbr.rel (0) target = $region73
    $region72: #{tpu_custom_call.1} parent=1 // pred_region
      %s1638 = ssub.s32 1024, 1024
      %1639 = vsyncadd [#allocation13], %s1638
      %s1640 = sshll.u32 [#allocation12], 4
      %s1641 = int_to_ptr.vmem [resolvable:$true] %s1640
      %1646 = dma.vmem_to_hbm [thread:$0]  %s1641, 1024, %s13, [#allocation13], 64, 64, 4
    $region73: #{tpu_custom_call.1} parent=1 // pred_fallthru
      _
    // Predicated region
    $region74: #{tpu_custom_call.1} parent=1 // pred_check
      _
    $region75: #{tpu_custom_call.1} parent=1 // pred_check_branch
      %1648 = sbr.rel (0) target = $region77
    $region76: #{tpu_custom_call.1} parent=1 // pred_region
      %1649 = dma.done [#allocation4], 1024
    $region77: #{tpu_custom_call.1} parent=1 // pred_fallthru
      _
    // Predicated region
    $region78: #{tpu_custom_call.1} parent=1 // pred_check
      _
    $region79: #{tpu_custom_call.1} parent=1 // pred_check_branch
      %1651 = sbr.rel (0) target = $region81
    $region80: #{tpu_custom_call.1} parent=1 // pred_region
      %1652 = dma.done [#allocation13], 1024
    $region81: #{tpu_custom_call.1} parent=1 // pred_fallthru
      _
    %1653 = vsyncpa [#allocation3], 1
    %1654 = vsyncpa [#allocation10], 1
    %1655 = vsyncpa [#allocation4], 1
    %1656 = vsyncpa [#allocation13], 1
    %1657 = vsyncpa [#allocation5], 1
    %1658 = vsyncpa [#allocation7], 1

</llo_original>
